<compile_context>
chip_gen: v5e
topology: v5e:2x2
jax: 0.10.0
libtpu: 0.0.40
codegen_flags: <defaults>
</compile_context>

<pallas_src>
import jax
import jax.numpy as jnp
import numpy as np
from jax.experimental import pallas as pl
from jax.experimental.pallas import tpu as pltpu

# ---- sizes (small, consistent with the module) ----
B = 2            # batch_size
SEG_LEN = 6      # segment_len
PRED_T = 4       # pred_timesteps
EMBED = 32       # input_embed_size
HID = 32         # box_enc_size == flow_enc_size == dec_hidden_size
PRED_IN = 32     # predictor_input_size
PRED_DIM = 4     # pred_dim
FLOW_DIM = 50    # 5*5*2
IN_DIM = 4 + FLOW_DIM  # 54: [box | flow] fused input


# ---------------- Pallas kernel ----------------
def fol_kernel(xin_ref,
               we_ref, be_ref,            # fused box/flow embedding (block-diag)
               wih_ref, bih_ref,          # fused enc GRU W_ih (gate-interleaved, block-diag)
               whh_ref, bhh_ref,          # fused enc GRU W_hh (gate-interleaved, block-diag)
               wdec_ref, bdec_ref,        # dec GRU over [pred_in | h], r/z folded -> 128 cols
               wout_ref, bout_ref,        # fused hidden_to_pred_input | hidden_to_pred
               out_ref,
               gi_scr,                    # (12, 192) VMEM: hoisted encoder gi for all steps
               xh_scr):                   # (12, 64)  VMEM: decoder staging [pred_inputs | h]
    H2 = 2 * HID          # 64  (box + flow hidden concatenated)
    NB = SEG_LEN * B      # 12

    # ---- batched, x-dependent half of the encoder (hoisted out of the recurrence) ----
    # One embed matmul (12,54)@(54,64) + one gi matmul (12,64)@(64,192) for all 6 steps.
    e_all = jax.nn.relu(
        jnp.dot(xin_ref[...], we_ref[...], preferred_element_type=jnp.float32) + be_ref[...])
    gi_scr[...] = (jnp.dot(e_all, wih_ref[...], preferred_element_type=jnp.float32)
                   + bih_ref[...])

    # Decoder staging buffer: [pred_inputs | h]; pred_inputs starts at zero.
    xh_scr[...] = jnp.zeros((NB, PRED_IN + HID), jnp.float32)

    # ---- encoder recurrence: only the h-dependent (2,64)@(64,192) matmul is serial ----
    h_both = jnp.zeros((B, H2), jnp.float32)            # [box_h | flow_h], one vreg
    for i in range(SEG_LEN):                            # static unroll (short, fixed)
        gi = gi_scr[i * B:(i + 1) * B, :]               # (B, 192), precomputed
        gh = (jnp.dot(h_both, whh_ref[...], preferred_element_type=jnp.float32)
              + bhh_ref[...])                           # (B, 192)
        r = jax.nn.sigmoid(gi[:, 0:H2] + gh[:, 0:H2])
        z = jax.nn.sigmoid(gi[:, H2:2 * H2] + gh[:, H2:2 * H2])
        n = jnp.tanh(gi[:, 2 * H2:3 * H2] + r * gh[:, 2 * H2:3 * H2])
        h_both = (1.0 - z) * n + z * h_both
        # enc_concat_type == 'avg': stash averaged hidden as this row-block's decoder h0
        xh_scr[i * B:(i + 1) * B, PRED_IN:] = (h_both[:, 0:HID] + h_both[:, HID:H2]) * 0.5

    # ---- decoder: batched over SEG_LEN, only PRED_T serial GRU steps ----
    # Gate layout after the r/z fold: [r(32) | z(32) | gi_n(32) | gh_n(32)] = 128 lanes.
    for j in range(PRED_T):                             # static unroll
        xh = xh_scr[...]                                # (12, 64) = [pred_inputs | h]
        h_prev = xh[:, PRED_IN:]
        g = (jnp.dot(xh, wdec_ref[...], preferred_element_type=jnp.float32)
             + bdec_ref[...])                           # (12, 128)
        r = jax.nn.sigmoid(g[:, 0:HID])
        z = jax.nn.sigmoid(g[:, HID:2 * HID])
        n = jnp.tanh(g[:, 2 * HID:3 * HID] + r * g[:, 3 * HID:4 * HID])
        h = (1.0 - z) * n + z * h_prev
        # fused hidden_to_pred_input (ReLU) | hidden_to_pred (Tanh)
        o = (jnp.dot(h, wout_ref[...], preferred_element_type=jnp.float32)
             + bout_ref[...])                           # (12, 36)
        out_ref[:, j * PRED_DIM:(j + 1) * PRED_DIM] = jnp.tanh(o[:, PRED_IN:PRED_IN + PRED_DIM])
        if j < PRED_T - 1:                              # last step needs no write-back
            xh_scr[:, 0:PRED_IN] = jax.nn.relu(o[:, 0:PRED_IN])
            xh_scr[:, PRED_IN:] = h


# ---------------- parameter packing (JAX glue, done once) ----------------
def pack_params(p):
    (be_w, be_b, fe_w, fe_b,
     bx_wih, bx_whh, bx_bih, bx_bhh,
     fl_wih, fl_whh, fl_bih, fl_bhh,
     h2pi_w, h2pi_b,
     de_wih, de_whh, de_bih, de_bhh,
     h2p_w, h2p_b) = p
    f32 = jnp.float32

    # 1) box/flow input embedding fused as block-diag: [box_t|flow_t] @ W -> [eb|ef]
    W_embed = jnp.block([[be_w, jnp.zeros((4, EMBED), f32)],
                         [jnp.zeros((FLOW_DIM, EMBED), f32), fe_w]])          # (54, 64)
    b_embed = jnp.concatenate([be_b, fe_b], axis=-1)                          # (1, 64)

    def interleave_gates(wb, wf):
        # (.., 3H) x2 -> (.., 6H) laid out as [r_b|r_f|z_b|z_f|n_b|n_f]
        return jnp.concatenate([wb[..., 0:HID], wf[..., 0:HID],
                                wb[..., HID:2 * HID], wf[..., HID:2 * HID],
                                wb[..., 2 * HID:], wf[..., 2 * HID:]], axis=-1)

    def pack_pair(wb, wf):
        # input order [box | flow]; output gate-interleaved as above
        db, df = wb.shape[0], wf.shape[0]
        zb = jnp.zeros((db, HID), f32)
        zf = jnp.zeros((df, HID), f32)
        top = jnp.concatenate([wb[:, 0:HID], zb, wb[:, HID:2 * HID], zb,
                               wb[:, 2 * HID:], zb], axis=-1)
        bot = jnp.concatenate([zf, wf[:, 0:HID], zf, wf[:, HID:2 * HID],
                               zf, wf[:, 2 * HID:]], axis=-1)
        return jnp.concatenate([top, bot], axis=0)                            # (db+df, 192)

    # 2) encoder GRU: gi and gh kept separate so gi can be hoisted/batched over T.
    W_ih_enc = pack_pair(bx_wih, fl_wih)                                      # (64, 192)
    b_ih_enc = interleave_gates(bx_bih, fl_bih)                               # (1, 192)
    W_hh_enc = pack_pair(bx_whh, fl_whh)                                      # (64, 192)
    b_hh_enc = interleave_gates(bx_bhh, fl_bhh)                               # (1, 192)

    # 3) decoder GRU over [pred_inputs | h]; r/z columns dense (gi+gh add folded),
    #    gi_n / gh_n kept separate for the r * (W_hn h + b_hn) term.
    #    Columns: [r(32) | z(32) | gi_n(32) | gh_n(32)]  -> (64, 128)
    zx = jnp.zeros((PRED_IN, HID), f32)
    zh = jnp.zeros((HID, HID), f32)
    W_dec = jnp.concatenate([
        jnp.concatenate([de_wih[:, 0:HID], de_wih[:, HID:2 * HID],
                         de_wih[:, 2 * HID:], zx], axis=-1),
        jnp.concatenate([de_whh[:, 0:HID], de_whh[:, HID:2 * HID],
                         zh, de_whh[:, 2 * HID:]], axis=-1),
    ], axis=0)                                                                # (64, 128)
    b_dec = jnp.concatenate([de_bih[:, 0:HID] + de_bhh[:, 0:HID],
                             de_bih[:, HID:2 * HID] + de_bhh[:, HID:2 * HID],
                             de_bih[:, 2 * HID:], de_bhh[:, 2 * HID:]], axis=-1)  # (1, 128)

    # 4) fused output linears: [hidden_to_pred_input (ReLU) | hidden_to_pred (Tanh)]
    W_out = jnp.concatenate([h2pi_w, h2p_w], axis=-1)                         # (32, 36)
    b_out = jnp.concatenate([h2pi_b, h2p_b], axis=-1)                         # (1, 36)

    return (W_embed, b_embed, W_ih_enc, b_ih_enc, W_hh_enc, b_hh_enc,
            W_dec, b_dec, W_out, b_out)


# ---------------- wrapper ----------------
def fol_forward(box, flow, packed):
    flow_flat = flow.reshape(B, SEG_LEN, -1)                    # (B, T, 50), same as torch .view
    xin = jnp.concatenate([box, flow_flat], axis=-1)            # (B, T, 54)
    # Row order i*B + b so the kernel can batch embeddings / gi over all timesteps.
    xin = jnp.transpose(xin, (1, 0, 2)).reshape(SEG_LEN * B, IN_DIM)

    vmem = pl.BlockSpec(memory_space=pltpu.MemorySpace.VMEM)
    out_flat = pl.pallas_call(
        fol_kernel,
        out_shape=jax.ShapeDtypeStruct((SEG_LEN * B, PRED_T * PRED_DIM), jnp.float32),
        in_specs=[vmem] * (1 + len(packed)),
        out_specs=vmem,
        scratch_shapes=[
            pltpu.VMEM((SEG_LEN * B, 6 * HID), jnp.float32),        # hoisted encoder gi
            pltpu.VMEM((SEG_LEN * B, PRED_IN + HID), jnp.float32),  # decoder [pred_in | h]
        ],
    )(xin, *packed)
    out = out_flat.reshape(SEG_LEN, B, PRED_T, PRED_DIM)        # row order was i*B + b
    return jnp.transpose(out, (1, 0, 2, 3))                     # (B, T, P, pred_dim)


# ---------------- deterministic parameter init (PyTorch shapes, pre-transposed) ----------------
def init_params(key):
    shapes = [
        (4, EMBED), (1, EMBED),            # box_embed  W, b
        (FLOW_DIM, EMBED), (1, EMBED),     # flow_embed W, b
        (EMBED, 3 * HID), (HID, 3 * HID), (1, 3 * HID), (1, 3 * HID),   # box enc GRU
        (EMBED, 3 * HID), (HID, 3 * HID), (1, 3 * HID), (1, 3 * HID),   # flow enc GRU
        (HID, PRED_IN), (1, PRED_IN),      # hidden_to_pred_input
        (PRED_IN, 3 * HID), (HID, 3 * HID), (1, 3 * HID), (1, 3 * HID), # dec GRU
        (HID, PRED_DIM), (1, PRED_DIM),    # hidden_to_pred
    ]
    keys = jax.random.split(key, len(shapes))
    return tuple(jax.random.normal(k, s, jnp.float32) * 0.1 for k, s in zip(keys, shapes))


# ---------------- pure-JAX reference (unfused, straight PyTorch translation) ----------------
def ref_forward(box, flow, p):
    (be_w, be_b, fe_w, fe_b,
     bx_wih, bx_whh, bx_bih, bx_bhh,
     fl_wih, fl_whh, fl_bih, fl_bhh,
     h2pi_w, h2pi_b,
     de_wih, de_whh, de_bih, de_bhh,
     h2p_w, h2p_b) = p

    def gru(x, h, wih, whh, bih, bhh):
        gi = x @ wih + bih
        gh = h @ whh + bhh
        r = jax.nn.sigmoid(gi[:, :HID] + gh[:, :HID])
        z = jax.nn.sigmoid(gi[:, HID:2 * HID] + gh[:, HID:2 * HID])
        n = jnp.tanh(gi[:, 2 * HID:] + r * gh[:, 2 * HID:])
        return (1.0 - z) * n + z * h

    flow_flat = flow.reshape(B, SEG_LEN, -1)
    box_h = jnp.zeros((B, HID), jnp.float32)
    flow_h = jnp.zeros((B, HID), jnp.float32)
    out = np.zeros((B, SEG_LEN, PRED_T, PRED_DIM), np.float32)
    for i in range(SEG_LEN):
        eb = jax.nn.relu(box[:, i, :] @ be_w + be_b)
        ef = jax.nn.relu(flow_flat[:, i, :] @ fe_w + fe_b)
        box_h = gru(eb, box_h, bx_wih, bx_whh, bx_bih, bx_bhh)
        flow_h = gru(ef, flow_h, fl_wih, fl_whh, fl_bih, fl_bhh)
        h = (box_h + flow_h) * 0.5
        pred_inputs = jnp.zeros((B, PRED_IN), jnp.float32)
        for j in range(PRED_T):
            h = gru(pred_inputs, h, de_wih, de_whh, de_bih, de_bhh)
            pred_inputs = jax.nn.relu(h @ h2pi_w + h2pi_b)
            out[:, i, j, :] = np.asarray(jnp.tanh(h @ h2p_w + h2p_b))
    return out


if __name__ == "__main__":
    key = jax.random.PRNGKey(0)
    k_box, k_flow, k_ego, k_par = jax.random.split(key, 4)

    box = jax.random.normal(k_box, (B, SEG_LEN, 4), jnp.float32)
    flow = jax.random.normal(k_flow, (B, SEG_LEN, 5, 5, 2), jnp.float32)
    # unused: with_ego=False (ego branch in the PyTorch forward is dead code)
    ego_pred = jax.random.normal(k_ego, (B, SEG_LEN, PRED_T, 3), jnp.float32)
    params = init_params(k_par)
    packed = pack_params(params)

    out = jax.block_until_ready(fol_forward(box, flow, packed))

    ref = ref_forward(box, flow, params)
    assert out.shape == (B, SEG_LEN, PRED_T, PRED_DIM)
    np.testing.assert_allclose(np.asarray(out), ref, rtol=1e-4, atol=1e-5)

    print("KERNEL_OK")
</pallas_src>

<mosaic_0001>
module attributes {stable_mosaic.version = 11 : i64} {
  func.func @fol_kernel(%arg0: memref<12x54xf32, #tpu.memory_space<vmem>>, %arg1: memref<54x64xf32, #tpu.memory_space<vmem>>, %arg2: memref<1x64xf32, #tpu.memory_space<vmem>>, %arg3: memref<64x192xf32, #tpu.memory_space<vmem>>, %arg4: memref<1x192xf32, #tpu.memory_space<vmem>>, %arg5: memref<64x192xf32, #tpu.memory_space<vmem>>, %arg6: memref<1x192xf32, #tpu.memory_space<vmem>>, %arg7: memref<64x128xf32, #tpu.memory_space<vmem>>, %arg8: memref<1x128xf32, #tpu.memory_space<vmem>>, %arg9: memref<32x36xf32, #tpu.memory_space<vmem>>, %arg10: memref<1x36xf32, #tpu.memory_space<vmem>>, %arg11: memref<12x16xf32, #tpu.memory_space<vmem>>, %arg12: memref<12x192xf32, #tpu.memory_space<vmem>>, %arg13: memref<12x64xf32, #tpu.memory_space<vmem>>) attributes {dimension_semantics = [], scalar_prefetch = 0 : i64, scratch_operands = 2 : i64, tpu.core_type = #tpu.core_type<tc>} {
    %c0 = arith.constant 0 : index
    %c0_0 = arith.constant 0 : index
    %0 = vector.load %arg0[%c0, %c0_0] : memref<12x54xf32, #tpu.memory_space<vmem>>, vector<12x54xf32>
    %c0_1 = arith.constant 0 : index
    %c0_2 = arith.constant 0 : index
    %1 = vector.load %arg1[%c0_1, %c0_2] : memref<54x64xf32, #tpu.memory_space<vmem>>, vector<54x64xf32>
    %cst = arith.constant dense<0.000000e+00> : vector<12x64xf32>
    %2 = tpu.matmul %0, %1, %cst {dimension_numbers = #tpu.dot_dimension_numbers<[1], [0], [0], [1], [0, 0, 1, 1], [], []>} : vector<12x54xf32>, vector<54x64xf32>, vector<12x64xf32> -> vector<12x64xf32>
    %c0_3 = arith.constant 0 : index
    %c0_4 = arith.constant 0 : index
    %3 = vector.load %arg2[%c0_3, %c0_4] : memref<1x64xf32, #tpu.memory_space<vmem>>, vector<1x64xf32>
    %4 = vector.broadcast %3 : vector<1x64xf32> to vector<12x64xf32>
    %5 = arith.addf %2, %4 : vector<12x64xf32>
    %cst_5 = arith.constant 0.000000e+00 : f32
    %6 = vector.broadcast %cst_5 : f32 to vector<12x64xf32>
    %7 = arith.maximumf %5, %6 : vector<12x64xf32>
    %c0_6 = arith.constant 0 : index
    %c0_7 = arith.constant 0 : index
    %8 = vector.load %arg3[%c0_6, %c0_7] : memref<64x192xf32, #tpu.memory_space<vmem>>, vector<64x192xf32>
    %cst_8 = arith.constant dense<0.000000e+00> : vector<12x192xf32>
    %9 = tpu.matmul %7, %8, %cst_8 {dimension_numbers = #tpu.dot_dimension_numbers<[1], [0], [0], [1], [0, 0, 1, 1], [], []>} : vector<12x64xf32>, vector<64x192xf32>, vector<12x192xf32> -> vector<12x192xf32>
    %c0_9 = arith.constant 0 : index
    %c0_10 = arith.constant 0 : index
    %10 = vector.load %arg4[%c0_9, %c0_10] : memref<1x192xf32, #tpu.memory_space<vmem>>, vector<1x192xf32>
    %11 = vector.broadcast %10 : vector<1x192xf32> to vector<12x192xf32>
    %12 = arith.addf %9, %11 : vector<12x192xf32>
    %c0_11 = arith.constant 0 : index
    %c0_12 = arith.constant 0 : index
    %13 = vector.load %arg12[%c0_11, %c0_12] : memref<12x192xf32, #tpu.memory_space<vmem>>, vector<12x192xf32>
    tpu.vector_store %arg12[%c0_11, %c0_12], %12 {strides = array<i32>} : memref<12x192xf32, #tpu.memory_space<vmem>>, vector<12x192xf32>,
    %cst_13 = arith.constant 0.000000e+00 : f32
    %14 = vector.broadcast %cst_13 : f32 to vector<12x64xf32>
    %c0_14 = arith.constant 0 : index
    %c0_15 = arith.constant 0 : index
    %15 = vector.load %arg13[%c0_14, %c0_15] : memref<12x64xf32, #tpu.memory_space<vmem>>, vector<12x64xf32>
    tpu.vector_store %arg13[%c0_14, %c0_15], %14 {strides = array<i32>} : memref<12x64xf32, #tpu.memory_space<vmem>>, vector<12x64xf32>,
    %cst_16 = arith.constant 0.000000e+00 : f32
    %16 = vector.broadcast %cst_16 : f32 to vector<2x64xf32>
    %c0_17 = arith.constant 0 : index
    %c0_18 = arith.constant 0 : index
    %17 = vector.load %arg12[%c0_17, %c0_18] : memref<12x192xf32, #tpu.memory_space<vmem>>, vector<2x192xf32>
    %c0_19 = arith.constant 0 : index
    %c0_20 = arith.constant 0 : index
    %18 = vector.load %arg5[%c0_19, %c0_20] : memref<64x192xf32, #tpu.memory_space<vmem>>, vector<64x192xf32>
    %cst_21 = arith.constant dense<0.000000e+00> : vector<2x192xf32>
    %19 = tpu.matmul %16, %18, %cst_21 {dimension_numbers = #tpu.dot_dimension_numbers<[1], [0], [0], [1], [0, 0, 1, 1], [], []>} : vector<2x64xf32>, vector<64x192xf32>, vector<2x192xf32> -> vector<2x192xf32>
    %c0_22 = arith.constant 0 : index
    %c0_23 = arith.constant 0 : index
    %20 = vector.load %arg6[%c0_22, %c0_23] : memref<1x192xf32, #tpu.memory_space<vmem>>, vector<1x192xf32>
    %21 = vector.broadcast %20 : vector<1x192xf32> to vector<2x192xf32>
    %22 = arith.addf %19, %21 : vector<2x192xf32>
    %23 = vector.extract_strided_slice %17 {offsets = [0, 0], sizes = [2, 64], strides = [1, 1]} : vector<2x192xf32> to vector<2x64xf32>
    %24 = vector.extract_strided_slice %22 {offsets = [0, 0], sizes = [2, 64], strides = [1, 1]} : vector<2x192xf32> to vector<2x64xf32>
    %25 = arith.addf %23, %24 : vector<2x64xf32>
    %26 = arith.negf %25 : vector<2x64xf32>
    %27 = math.exp %26 : vector<2x64xf32>
    %cst_24 = arith.constant 1.000000e+00 : f32
    %28 = vector.broadcast %cst_24 : f32 to vector<2x64xf32>
    %29 = arith.addf %28, %27 : vector<2x64xf32>
    %30 = arith.divf %28, %29 : vector<2x64xf32>
    %31 = vector.extract_strided_slice %17 {offsets = [0, 64], sizes = [2, 64], strides = [1, 1]} : vector<2x192xf32> to vector<2x64xf32>
    %32 = vector.extract_strided_slice %22 {offsets = [0, 64], sizes = [2, 64], strides = [1, 1]} : vector<2x192xf32> to vector<2x64xf32>
    %33 = arith.addf %31, %32 : vector<2x64xf32>
    %34 = arith.negf %33 : vector<2x64xf32>
    %35 = math.exp %34 : vector<2x64xf32>
    %cst_25 = arith.constant 1.000000e+00 : f32
    %36 = vector.broadcast %cst_25 : f32 to vector<2x64xf32>
    %37 = arith.addf %36, %35 : vector<2x64xf32>
    %38 = arith.divf %36, %37 : vector<2x64xf32>
    %39 = vector.extract_strided_slice %17 {offsets = [0, 128], sizes = [2, 64], strides = [1, 1]} : vector<2x192xf32> to vector<2x64xf32>
    %40 = vector.extract_strided_slice %22 {offsets = [0, 128], sizes = [2, 64], strides = [1, 1]} : vector<2x192xf32> to vector<2x64xf32>
    %41 = arith.mulf %30, %40 : vector<2x64xf32>
    %42 = arith.addf %39, %41 : vector<2x64xf32>
    %43 = math.tanh %42 : vector<2x64xf32>
    %cst_26 = arith.constant 1.000000e+00 : f32
    %44 = vector.broadcast %cst_26 : f32 to vector<2x64xf32>
    %45 = arith.subf %44, %38 : vector<2x64xf32>
    %46 = arith.mulf %45, %43 : vector<2x64xf32>
    %47 = arith.mulf %38, %16 : vector<2x64xf32>
    %48 = arith.addf %46, %47 : vector<2x64xf32>
    %49 = vector.extract_strided_slice %48 {offsets = [0, 0], sizes = [2, 32], strides = [1, 1]} : vector<2x64xf32> to vector<2x32xf32>
    %50 = vector.extract_strided_slice %48 {offsets = [0, 32], sizes = [2, 32], strides = [1, 1]} : vector<2x64xf32> to vector<2x32xf32>
    %51 = arith.addf %49, %50 : vector<2x32xf32>
    %cst_27 = arith.constant 5.000000e-01 : f32
    %52 = vector.broadcast %cst_27 : f32 to vector<2x32xf32>
    %53 = arith.mulf %51, %52 : vector<2x32xf32>
    %c0_28 = arith.constant 0 : index
    %c32 = arith.constant 32 : index
    %54 = vector.load %arg13[%c0_28, %c32] : memref<12x64xf32, #tpu.memory_space<vmem>>, vector<2x32xf32>
    tpu.vector_store %arg13[%c0_28, %c32], %53 {strides = array<i32>} : memref<12x64xf32, #tpu.memory_space<vmem>>, vector<2x32xf32>,
    %c2 = arith.constant 2 : index
    %c0_29 = arith.constant 0 : index
    %55 = vector.load %arg12[%c2, %c0_29] : memref<12x192xf32, #tpu.memory_space<vmem>>, vector<2x192xf32>
    %c0_30 = arith.constant 0 : index
    %c0_31 = arith.constant 0 : index
    %56 = vector.load %arg5[%c0_30, %c0_31] : memref<64x192xf32, #tpu.memory_space<vmem>>, vector<64x192xf32>
    %cst_32 = arith.constant dense<0.000000e+00> : vector<2x192xf32>
    %57 = tpu.matmul %48, %56, %cst_32 {dimension_numbers = #tpu.dot_dimension_numbers<[1], [0], [0], [1], [0, 0, 1, 1], [], []>} : vector<2x64xf32>, vector<64x192xf32>, vector<2x192xf32> -> vector<2x192xf32>
    %c0_33 = arith.constant 0 : index
    %c0_34 = arith.constant 0 : index
    %58 = vector.load %arg6[%c0_33, %c0_34] : memref<1x192xf32, #tpu.memory_space<vmem>>, vector<1x192xf32>
    %59 = vector.broadcast %58 : vector<1x192xf32> to vector<2x192xf32>
    %60 = arith.addf %57, %59 : vector<2x192xf32>
    %61 = vector.extract_strided_slice %55 {offsets = [0, 0], sizes = [2, 64], strides = [1, 1]} : vector<2x192xf32> to vector<2x64xf32>
    %62 = vector.extract_strided_slice %60 {offsets = [0, 0], sizes = [2, 64], strides = [1, 1]} : vector<2x192xf32> to vector<2x64xf32>
    %63 = arith.addf %61, %62 : vector<2x64xf32>
    %64 = arith.negf %63 : vector<2x64xf32>
    %65 = math.exp %64 : vector<2x64xf32>
    %cst_35 = arith.constant 1.000000e+00 : f32
    %66 = vector.broadcast %cst_35 : f32 to vector<2x64xf32>
    %67 = arith.addf %66, %65 : vector<2x64xf32>
    %68 = arith.divf %66, %67 : vector<2x64xf32>
    %69 = vector.extract_strided_slice %55 {offsets = [0, 64], sizes = [2, 64], strides = [1, 1]} : vector<2x192xf32> to vector<2x64xf32>
    %70 = vector.extract_strided_slice %60 {offsets = [0, 64], sizes = [2, 64], strides = [1, 1]} : vector<2x192xf32> to vector<2x64xf32>
    %71 = arith.addf %69, %70 : vector<2x64xf32>
    %72 = arith.negf %71 : vector<2x64xf32>
    %73 = math.exp %72 : vector<2x64xf32>
    %cst_36 = arith.constant 1.000000e+00 : f32
    %74 = vector.broadcast %cst_36 : f32 to vector<2x64xf32>
    %75 = arith.addf %74, %73 : vector<2x64xf32>
    %76 = arith.divf %74, %75 : vector<2x64xf32>
    %77 = vector.extract_strided_slice %55 {offsets = [0, 128], sizes = [2, 64], strides = [1, 1]} : vector<2x192xf32> to vector<2x64xf32>
    %78 = vector.extract_strided_slice %60 {offsets = [0, 128], sizes = [2, 64], strides = [1, 1]} : vector<2x192xf32> to vector<2x64xf32>
    %79 = arith.mulf %68, %78 : vector<2x64xf32>
    %80 = arith.addf %77, %79 : vector<2x64xf32>
    %81 = math.tanh %80 : vector<2x64xf32>
    %cst_37 = arith.constant 1.000000e+00 : f32
    %82 = vector.broadcast %cst_37 : f32 to vector<2x64xf32>
    %83 = arith.subf %82, %76 : vector<2x64xf32>
    %84 = arith.mulf %83, %81 : vector<2x64xf32>
    %85 = arith.mulf %76, %48 : vector<2x64xf32>
    %86 = arith.addf %84, %85 : vector<2x64xf32>
    %87 = vector.extract_strided_slice %86 {offsets = [0, 0], sizes = [2, 32], strides = [1, 1]} : vector<2x64xf32> to vector<2x32xf32>
    %88 = vector.extract_strided_slice %86 {offsets = [0, 32], sizes = [2, 32], strides = [1, 1]} : vector<2x64xf32> to vector<2x32xf32>
    %89 = arith.addf %87, %88 : vector<2x32xf32>
    %cst_38 = arith.constant 5.000000e-01 : f32
    %90 = vector.broadcast %cst_38 : f32 to vector<2x32xf32>
    %91 = arith.mulf %89, %90 : vector<2x32xf32>
    %c2_39 = arith.constant 2 : index
    %c32_40 = arith.constant 32 : index
    %92 = vector.load %arg13[%c2_39, %c32_40] : memref<12x64xf32, #tpu.memory_space<vmem>>, vector<2x32xf32>
    tpu.vector_store %arg13[%c2_39, %c32_40], %91 {strides = array<i32>} : memref<12x64xf32, #tpu.memory_space<vmem>>, vector<2x32xf32>,
    %c4 = arith.constant 4 : index
    %c0_41 = arith.constant 0 : index
    %93 = vector.load %arg12[%c4, %c0_41] : memref<12x192xf32, #tpu.memory_space<vmem>>, vector<2x192xf32>
    %c0_42 = arith.constant 0 : index
    %c0_43 = arith.constant 0 : index
    %94 = vector.load %arg5[%c0_42, %c0_43] : memref<64x192xf32, #tpu.memory_space<vmem>>, vector<64x192xf32>
    %cst_44 = arith.constant dense<0.000000e+00> : vector<2x192xf32>
    %95 = tpu.matmul %86, %94, %cst_44 {dimension_numbers = #tpu.dot_dimension_numbers<[1], [0], [0], [1], [0, 0, 1, 1], [], []>} : vector<2x64xf32>, vector<64x192xf32>, vector<2x192xf32> -> vector<2x192xf32>
    %c0_45 = arith.constant 0 : index
    %c0_46 = arith.constant 0 : index
    %96 = vector.load %arg6[%c0_45, %c0_46] : memref<1x192xf32, #tpu.memory_space<vmem>>, vector<1x192xf32>
    %97 = vector.broadcast %96 : vector<1x192xf32> to vector<2x192xf32>
    %98 = arith.addf %95, %97 : vector<2x192xf32>
    %99 = vector.extract_strided_slice %93 {offsets = [0, 0], sizes = [2, 64], strides = [1, 1]} : vector<2x192xf32> to vector<2x64xf32>
    %100 = vector.extract_strided_slice %98 {offsets = [0, 0], sizes = [2, 64], strides = [1, 1]} : vector<2x192xf32> to vector<2x64xf32>
    %101 = arith.addf %99, %100 : vector<2x64xf32>
    %102 = arith.negf %101 : vector<2x64xf32>
    %103 = math.exp %102 : vector<2x64xf32>
    %cst_47 = arith.constant 1.000000e+00 : f32
    %104 = vector.broadcast %cst_47 : f32 to vector<2x64xf32>
    %105 = arith.addf %104, %103 : vector<2x64xf32>
    %106 = arith.divf %104, %105 : vector<2x64xf32>
    %107 = vector.extract_strided_slice %93 {offsets = [0, 64], sizes = [2, 64], strides = [1, 1]} : vector<2x192xf32> to vector<2x64xf32>
    %108 = vector.extract_strided_slice %98 {offsets = [0, 64], sizes = [2, 64], strides = [1, 1]} : vector<2x192xf32> to vector<2x64xf32>
    %109 = arith.addf %107, %108 : vector<2x64xf32>
    %110 = arith.negf %109 : vector<2x64xf32>
    %111 = math.exp %110 : vector<2x64xf32>
    %cst_48 = arith.constant 1.000000e+00 : f32
    %112 = vector.broadcast %cst_48 : f32 to vector<2x64xf32>
    %113 = arith.addf %112, %111 : vector<2x64xf32>
    %114 = arith.divf %112, %113 : vector<2x64xf32>
    %115 = vector.extract_strided_slice %93 {offsets = [0, 128], sizes = [2, 64], strides = [1, 1]} : vector<2x192xf32> to vector<2x64xf32>
    %116 = vector.extract_strided_slice %98 {offsets = [0, 128], sizes = [2, 64], strides = [1, 1]} : vector<2x192xf32> to vector<2x64xf32>
    %117 = arith.mulf %106, %116 : vector<2x64xf32>
    %118 = arith.addf %115, %117 : vector<2x64xf32>
    %119 = math.tanh %118 : vector<2x64xf32>
    %cst_49 = arith.constant 1.000000e+00 : f32
    %120 = vector.broadcast %cst_49 : f32 to vector<2x64xf32>
    %121 = arith.subf %120, %114 : vector<2x64xf32>
    %122 = arith.mulf %121, %119 : vector<2x64xf32>
    %123 = arith.mulf %114, %86 : vector<2x64xf32>
    %124 = arith.addf %122, %123 : vector<2x64xf32>
    %125 = vector.extract_strided_slice %124 {offsets = [0, 0], sizes = [2, 32], strides = [1, 1]} : vector<2x64xf32> to vector<2x32xf32>
    %126 = vector.extract_strided_slice %124 {offsets = [0, 32], sizes = [2, 32], strides = [1, 1]} : vector<2x64xf32> to vector<2x32xf32>
    %127 = arith.addf %125, %126 : vector<2x32xf32>
    %cst_50 = arith.constant 5.000000e-01 : f32
    %128 = vector.broadcast %cst_50 : f32 to vector<2x32xf32>
    %129 = arith.mulf %127, %128 : vector<2x32xf32>
    %c4_51 = arith.constant 4 : index
    %c32_52 = arith.constant 32 : index
    %130 = vector.load %arg13[%c4_51, %c32_52] : memref<12x64xf32, #tpu.memory_space<vmem>>, vector<2x32xf32>
    tpu.vector_store %arg13[%c4_51, %c32_52], %129 {strides = array<i32>} : memref<12x64xf32, #tpu.memory_space<vmem>>, vector<2x32xf32>,
    %c6 = arith.constant 6 : index
    %c0_53 = arith.constant 0 : index
    %131 = vector.load %arg12[%c6, %c0_53] : memref<12x192xf32, #tpu.memory_space<vmem>>, vector<2x192xf32>
    %c0_54 = arith.constant 0 : index
    %c0_55 = arith.constant 0 : index
    %132 = vector.load %arg5[%c0_54, %c0_55] : memref<64x192xf32, #tpu.memory_space<vmem>>, vector<64x192xf32>
    %cst_56 = arith.constant dense<0.000000e+00> : vector<2x192xf32>
    %133 = tpu.matmul %124, %132, %cst_56 {dimension_numbers = #tpu.dot_dimension_numbers<[1], [0], [0], [1], [0, 0, 1, 1], [], []>} : vector<2x64xf32>, vector<64x192xf32>, vector<2x192xf32> -> vector<2x192xf32>
    %c0_57 = arith.constant 0 : index
    %c0_58 = arith.constant 0 : index
    %134 = vector.load %arg6[%c0_57, %c0_58] : memref<1x192xf32, #tpu.memory_space<vmem>>, vector<1x192xf32>
    %135 = vector.broadcast %134 : vector<1x192xf32> to vector<2x192xf32>
    %136 = arith.addf %133, %135 : vector<2x192xf32>
    %137 = vector.extract_strided_slice %131 {offsets = [0, 0], sizes = [2, 64], strides = [1, 1]} : vector<2x192xf32> to vector<2x64xf32>
    %138 = vector.extract_strided_slice %136 {offsets = [0, 0], sizes = [2, 64], strides = [1, 1]} : vector<2x192xf32> to vector<2x64xf32>
    %139 = arith.addf %137, %138 : vector<2x64xf32>
    %140 = arith.negf %139 : vector<2x64xf32>
    %141 = math.exp %140 : vector<2x64xf32>
    %cst_59 = arith.constant 1.000000e+00 : f32
    %142 = vector.broadcast %cst_59 : f32 to vector<2x64xf32>
    %143 = arith.addf %142, %141 : vector<2x64xf32>
    %144 = arith.divf %142, %143 : vector<2x64xf32>
    %145 = vector.extract_strided_slice %131 {offsets = [0, 64], sizes = [2, 64], strides = [1, 1]} : vector<2x192xf32> to vector<2x64xf32>
    %146 = vector.extract_strided_slice %136 {offsets = [0, 64], sizes = [2, 64], strides = [1, 1]} : vector<2x192xf32> to vector<2x64xf32>
    %147 = arith.addf %145, %146 : vector<2x64xf32>
    %148 = arith.negf %147 : vector<2x64xf32>
    %149 = math.exp %148 : vector<2x64xf32>
    %cst_60 = arith.constant 1.000000e+00 : f32
    %150 = vector.broadcast %cst_60 : f32 to vector<2x64xf32>
    %151 = arith.addf %150, %149 : vector<2x64xf32>
    %152 = arith.divf %150, %151 : vector<2x64xf32>
    %153 = vector.extract_strided_slice %131 {offsets = [0, 128], sizes = [2, 64], strides = [1, 1]} : vector<2x192xf32> to vector<2x64xf32>
    %154 = vector.extract_strided_slice %136 {offsets = [0, 128], sizes = [2, 64], strides = [1, 1]} : vector<2x192xf32> to vector<2x64xf32>
    %155 = arith.mulf %144, %154 : vector<2x64xf32>
    %156 = arith.addf %153, %155 : vector<2x64xf32>
    %157 = math.tanh %156 : vector<2x64xf32>
    %cst_61 = arith.constant 1.000000e+00 : f32
    %158 = vector.broadcast %cst_61 : f32 to vector<2x64xf32>
    %159 = arith.subf %158, %152 : vector<2x64xf32>
    %160 = arith.mulf %159, %157 : vector<2x64xf32>
    %161 = arith.mulf %152, %124 : vector<2x64xf32>
    %162 = arith.addf %160, %161 : vector<2x64xf32>
    %163 = vector.extract_strided_slice %162 {offsets = [0, 0], sizes = [2, 32], strides = [1, 1]} : vector<2x64xf32> to vector<2x32xf32>
    %164 = vector.extract_strided_slice %162 {offsets = [0, 32], sizes = [2, 32], strides = [1, 1]} : vector<2x64xf32> to vector<2x32xf32>
    %165 = arith.addf %163, %164 : vector<2x32xf32>
    %cst_62 = arith.constant 5.000000e-01 : f32
    %166 = vector.broadcast %cst_62 : f32 to vector<2x32xf32>
    %167 = arith.mulf %165, %166 : vector<2x32xf32>
    %c6_63 = arith.constant 6 : index
    %c32_64 = arith.constant 32 : index
    %168 = vector.load %arg13[%c6_63, %c32_64] : memref<12x64xf32, #tpu.memory_space<vmem>>, vector<2x32xf32>
    tpu.vector_store %arg13[%c6_63, %c32_64], %167 {strides = array<i32>} : memref<12x64xf32, #tpu.memory_space<vmem>>, vector<2x32xf32>,
    %c8 = arith.constant 8 : index
    %c0_65 = arith.constant 0 : index
    %169 = vector.load %arg12[%c8, %c0_65] : memref<12x192xf32, #tpu.memory_space<vmem>>, vector<2x192xf32>
    %c0_66 = arith.constant 0 : index
    %c0_67 = arith.constant 0 : index
    %170 = vector.load %arg5[%c0_66, %c0_67] : memref<64x192xf32, #tpu.memory_space<vmem>>, vector<64x192xf32>
    %cst_68 = arith.constant dense<0.000000e+00> : vector<2x192xf32>
    %171 = tpu.matmul %162, %170, %cst_68 {dimension_numbers = #tpu.dot_dimension_numbers<[1], [0], [0], [1], [0, 0, 1, 1], [], []>} : vector<2x64xf32>, vector<64x192xf32>, vector<2x192xf32> -> vector<2x192xf32>
    %c0_69 = arith.constant 0 : index
    %c0_70 = arith.constant 0 : index
    %172 = vector.load %arg6[%c0_69, %c0_70] : memref<1x192xf32, #tpu.memory_space<vmem>>, vector<1x192xf32>
    %173 = vector.broadcast %172 : vector<1x192xf32> to vector<2x192xf32>
    %174 = arith.addf %171, %173 : vector<2x192xf32>
    %175 = vector.extract_strided_slice %169 {offsets = [0, 0], sizes = [2, 64], strides = [1, 1]} : vector<2x192xf32> to vector<2x64xf32>
    %176 = vector.extract_strided_slice %174 {offsets = [0, 0], sizes = [2, 64], strides = [1, 1]} : vector<2x192xf32> to vector<2x64xf32>
    %177 = arith.addf %175, %176 : vector<2x64xf32>
    %178 = arith.negf %177 : vector<2x64xf32>
    %179 = math.exp %178 : vector<2x64xf32>
    %cst_71 = arith.constant 1.000000e+00 : f32
    %180 = vector.broadcast %cst_71 : f32 to vector<2x64xf32>
    %181 = arith.addf %180, %179 : vector<2x64xf32>
    %182 = arith.divf %180, %181 : vector<2x64xf32>
    %183 = vector.extract_strided_slice %169 {offsets = [0, 64], sizes = [2, 64], strides = [1, 1]} : vector<2x192xf32> to vector<2x64xf32>
    %184 = vector.extract_strided_slice %174 {offsets = [0, 64], sizes = [2, 64], strides = [1, 1]} : vector<2x192xf32> to vector<2x64xf32>
    %185 = arith.addf %183, %184 : vector<2x64xf32>
    %186 = arith.negf %185 : vector<2x64xf32>
    %187 = math.exp %186 : vector<2x64xf32>
    %cst_72 = arith.constant 1.000000e+00 : f32
    %188 = vector.broadcast %cst_72 : f32 to vector<2x64xf32>
    %189 = arith.addf %188, %187 : vector<2x64xf32>
    %190 = arith.divf %188, %189 : vector<2x64xf32>
    %191 = vector.extract_strided_slice %169 {offsets = [0, 128], sizes = [2, 64], strides = [1, 1]} : vector<2x192xf32> to vector<2x64xf32>
    %192 = vector.extract_strided_slice %174 {offsets = [0, 128], sizes = [2, 64], strides = [1, 1]} : vector<2x192xf32> to vector<2x64xf32>
    %193 = arith.mulf %182, %192 : vector<2x64xf32>
    %194 = arith.addf %191, %193 : vector<2x64xf32>
    %195 = math.tanh %194 : vector<2x64xf32>
    %cst_73 = arith.constant 1.000000e+00 : f32
    %196 = vector.broadcast %cst_73 : f32 to vector<2x64xf32>
    %197 = arith.subf %196, %190 : vector<2x64xf32>
    %198 = arith.mulf %197, %195 : vector<2x64xf32>
    %199 = arith.mulf %190, %162 : vector<2x64xf32>
    %200 = arith.addf %198, %199 : vector<2x64xf32>
    %201 = vector.extract_strided_slice %200 {offsets = [0, 0], sizes = [2, 32], strides = [1, 1]} : vector<2x64xf32> to vector<2x32xf32>
    %202 = vector.extract_strided_slice %200 {offsets = [0, 32], sizes = [2, 32], strides = [1, 1]} : vector<2x64xf32> to vector<2x32xf32>
    %203 = arith.addf %201, %202 : vector<2x32xf32>
    %cst_74 = arith.constant 5.000000e-01 : f32
    %204 = vector.broadcast %cst_74 : f32 to vector<2x32xf32>
    %205 = arith.mulf %203, %204 : vector<2x32xf32>
    %c8_75 = arith.constant 8 : index
    %c32_76 = arith.constant 32 : index
    %206 = vector.load %arg13[%c8_75, %c32_76] : memref<12x64xf32, #tpu.memory_space<vmem>>, vector<2x32xf32>
    tpu.vector_store %arg13[%c8_75, %c32_76], %205 {strides = array<i32>} : memref<12x64xf32, #tpu.memory_space<vmem>>, vector<2x32xf32>,
    %c10 = arith.constant 10 : index
    %c0_77 = arith.constant 0 : index
    %207 = vector.load %arg12[%c10, %c0_77] : memref<12x192xf32, #tpu.memory_space<vmem>>, vector<2x192xf32>
    %c0_78 = arith.constant 0 : index
    %c0_79 = arith.constant 0 : index
    %208 = vector.load %arg5[%c0_78, %c0_79] : memref<64x192xf32, #tpu.memory_space<vmem>>, vector<64x192xf32>
    %cst_80 = arith.constant dense<0.000000e+00> : vector<2x192xf32>
    %209 = tpu.matmul %200, %208, %cst_80 {dimension_numbers = #tpu.dot_dimension_numbers<[1], [0], [0], [1], [0, 0, 1, 1], [], []>} : vector<2x64xf32>, vector<64x192xf32>, vector<2x192xf32> -> vector<2x192xf32>
    %c0_81 = arith.constant 0 : index
    %c0_82 = arith.constant 0 : index
    %210 = vector.load %arg6[%c0_81, %c0_82] : memref<1x192xf32, #tpu.memory_space<vmem>>, vector<1x192xf32>
    %211 = vector.broadcast %210 : vector<1x192xf32> to vector<2x192xf32>
    %212 = arith.addf %209, %211 : vector<2x192xf32>
    %213 = vector.extract_strided_slice %207 {offsets = [0, 0], sizes = [2, 64], strides = [1, 1]} : vector<2x192xf32> to vector<2x64xf32>
    %214 = vector.extract_strided_slice %212 {offsets = [0, 0], sizes = [2, 64], strides = [1, 1]} : vector<2x192xf32> to vector<2x64xf32>
    %215 = arith.addf %213, %214 : vector<2x64xf32>
    %216 = arith.negf %215 : vector<2x64xf32>
    %217 = math.exp %216 : vector<2x64xf32>
    %cst_83 = arith.constant 1.000000e+00 : f32
    %218 = vector.broadcast %cst_83 : f32 to vector<2x64xf32>
    %219 = arith.addf %218, %217 : vector<2x64xf32>
    %220 = arith.divf %218, %219 : vector<2x64xf32>
    %221 = vector.extract_strided_slice %207 {offsets = [0, 64], sizes = [2, 64], strides = [1, 1]} : vector<2x192xf32> to vector<2x64xf32>
    %222 = vector.extract_strided_slice %212 {offsets = [0, 64], sizes = [2, 64], strides = [1, 1]} : vector<2x192xf32> to vector<2x64xf32>
    %223 = arith.addf %221, %222 : vector<2x64xf32>
    %224 = arith.negf %223 : vector<2x64xf32>
    %225 = math.exp %224 : vector<2x64xf32>
    %cst_84 = arith.constant 1.000000e+00 : f32
    %226 = vector.broadcast %cst_84 : f32 to vector<2x64xf32>
    %227 = arith.addf %226, %225 : vector<2x64xf32>
    %228 = arith.divf %226, %227 : vector<2x64xf32>
    %229 = vector.extract_strided_slice %207 {offsets = [0, 128], sizes = [2, 64], strides = [1, 1]} : vector<2x192xf32> to vector<2x64xf32>
    %230 = vector.extract_strided_slice %212 {offsets = [0, 128], sizes = [2, 64], strides = [1, 1]} : vector<2x192xf32> to vector<2x64xf32>
    %231 = arith.mulf %220, %230 : vector<2x64xf32>
    %232 = arith.addf %229, %231 : vector<2x64xf32>
    %233 = math.tanh %232 : vector<2x64xf32>
    %cst_85 = arith.constant 1.000000e+00 : f32
    %234 = vector.broadcast %cst_85 : f32 to vector<2x64xf32>
    %235 = arith.subf %234, %228 : vector<2x64xf32>
    %236 = arith.mulf %235, %233 : vector<2x64xf32>
    %237 = arith.mulf %228, %200 : vector<2x64xf32>
    %238 = arith.addf %236, %237 : vector<2x64xf32>
    %239 = vector.extract_strided_slice %238 {offsets = [0, 0], sizes = [2, 32], strides = [1, 1]} : vector<2x64xf32> to vector<2x32xf32>
    %240 = vector.extract_strided_slice %238 {offsets = [0, 32], sizes = [2, 32], strides = [1, 1]} : vector<2x64xf32> to vector<2x32xf32>
    %241 = arith.addf %239, %240 : vector<2x32xf32>
    %cst_86 = arith.constant 5.000000e-01 : f32
    %242 = vector.broadcast %cst_86 : f32 to vector<2x32xf32>
    %243 = arith.mulf %241, %242 : vector<2x32xf32>
    %c10_87 = arith.constant 10 : index
    %c32_88 = arith.constant 32 : index
    %244 = vector.load %arg13[%c10_87, %c32_88] : memref<12x64xf32, #tpu.memory_space<vmem>>, vector<2x32xf32>
    tpu.vector_store %arg13[%c10_87, %c32_88], %243 {strides = array<i32>} : memref<12x64xf32, #tpu.memory_space<vmem>>, vector<2x32xf32>,
    %c0_89 = arith.constant 0 : index
    %c0_90 = arith.constant 0 : index
    %245 = vector.load %arg13[%c0_89, %c0_90] : memref<12x64xf32, #tpu.memory_space<vmem>>, vector<12x64xf32>
    %246 = vector.extract_strided_slice %245 {offsets = [0, 32], sizes = [12, 32], strides = [1, 1]} : vector<12x64xf32> to vector<12x32xf32>
    %c0_91 = arith.constant 0 : index
    %c0_92 = arith.constant 0 : index
    %247 = vector.load %arg7[%c0_91, %c0_92] : memref<64x128xf32, #tpu.memory_space<vmem>>, vector<64x128xf32>
    %cst_93 = arith.constant dense<0.000000e+00> : vector<12x128xf32>
    %248 = tpu.matmul %245, %247, %cst_93 {dimension_numbers = #tpu.dot_dimension_numbers<[1], [0], [0], [1], [0, 0, 1, 1], [], []>} : vector<12x64xf32>, vector<64x128xf32>, vector<12x128xf32> -> vector<12x128xf32>
    %c0_94 = arith.constant 0 : index
    %c0_95 = arith.constant 0 : index
    %249 = vector.load %arg8[%c0_94, %c0_95] : memref<1x128xf32, #tpu.memory_space<vmem>>, vector<1x128xf32>
    %250 = vector.broadcast %249 : vector<1x128xf32> to vector<12x128xf32>
    %251 = arith.addf %248, %250 : vector<12x128xf32>
    %252 = vector.extract_strided_slice %251 {offsets = [0, 0], sizes = [12, 32], strides = [1, 1]} : vector<12x128xf32> to vector<12x32xf32>
    %253 = arith.negf %252 : vector<12x32xf32>
    %254 = math.exp %253 : vector<12x32xf32>
    %cst_96 = arith.constant 1.000000e+00 : f32
    %255 = vector.broadcast %cst_96 : f32 to vector<12x32xf32>
    %256 = arith.addf %255, %254 : vector<12x32xf32>
    %257 = arith.divf %255, %256 : vector<12x32xf32>
    %258 = vector.extract_strided_slice %251 {offsets = [0, 32], sizes = [12, 32], strides = [1, 1]} : vector<12x128xf32> to vector<12x32xf32>
    %259 = arith.negf %258 : vector<12x32xf32>
    %260 = math.exp %259 : vector<12x32xf32>
    %cst_97 = arith.constant 1.000000e+00 : f32
    %261 = vector.broadcast %cst_97 : f32 to vector<12x32xf32>
    %262 = arith.addf %261, %260 : vector<12x32xf32>
    %263 = arith.divf %261, %262 : vector<12x32xf32>
    %264 = vector.extract_strided_slice %251 {offsets = [0, 64], sizes = [12, 32], strides = [1, 1]} : vector<12x128xf32> to vector<12x32xf32>
    %265 = vector.extract_strided_slice %251 {offsets = [0, 96], sizes = [12, 32], strides = [1, 1]} : vector<12x128xf32> to vector<12x32xf32>
    %266 = arith.mulf %257, %265 : vector<12x32xf32>
    %267 = arith.addf %264, %266 : vector<12x32xf32>
    %268 = math.tanh %267 : vector<12x32xf32>
    %cst_98 = arith.constant 1.000000e+00 : f32
    %269 = vector.broadcast %cst_98 : f32 to vector<12x32xf32>
    %270 = arith.subf %269, %263 : vector<12x32xf32>
    %271 = arith.mulf %270, %268 : vector<12x32xf32>
    %272 = arith.mulf %263, %246 : vector<12x32xf32>
    %273 = arith.addf %271, %272 : vector<12x32xf32>
    %c0_99 = arith.constant 0 : index
    %c0_100 = arith.constant 0 : index
    %274 = vector.load %arg9[%c0_99, %c0_100] : memref<32x36xf32, #tpu.memory_space<vmem>>, vector<32x36xf32>
    %cst_101 = arith.constant dense<0.000000e+00> : vector<12x36xf32>
    %275 = tpu.matmul %273, %274, %cst_101 {dimension_numbers = #tpu.dot_dimension_numbers<[1], [0], [0], [1], [0, 0, 1, 1], [], []>} : vector<12x32xf32>, vector<32x36xf32>, vector<12x36xf32> -> vector<12x36xf32>
    %c0_102 = arith.constant 0 : index
    %c0_103 = arith.constant 0 : index
    %276 = vector.load %arg10[%c0_102, %c0_103] : memref<1x36xf32, #tpu.memory_space<vmem>>, vector<1x36xf32>
    %277 = vector.broadcast %276 : vector<1x36xf32> to vector<12x36xf32>
    %278 = arith.addf %275, %277 : vector<12x36xf32>
    %279 = vector.extract_strided_slice %278 {offsets = [0, 32], sizes = [12, 4], strides = [1, 1]} : vector<12x36xf32> to vector<12x4xf32>
    %280 = math.tanh %279 : vector<12x4xf32>
    %c0_104 = arith.constant 0 : index
    %c0_105 = arith.constant 0 : index
    %281 = vector.load %arg11[%c0_104, %c0_105] : memref<12x16xf32, #tpu.memory_space<vmem>>, vector<12x4xf32>
    tpu.vector_store %arg11[%c0_104, %c0_105], %280 {strides = array<i32>} : memref<12x16xf32, #tpu.memory_space<vmem>>, vector<12x4xf32>,
    %282 = vector.extract_strided_slice %278 {offsets = [0, 0], sizes = [12, 32], strides = [1, 1]} : vector<12x36xf32> to vector<12x32xf32>
    %cst_106 = arith.constant 0.000000e+00 : f32
    %283 = vector.broadcast %cst_106 : f32 to vector<12x32xf32>
    %284 = arith.maximumf %282, %283 : vector<12x32xf32>
    %c0_107 = arith.constant 0 : index
    %c0_108 = arith.constant 0 : index
    %285 = vector.load %arg13[%c0_107, %c0_108] : memref<12x64xf32, #tpu.memory_space<vmem>>, vector<12x32xf32>
    tpu.vector_store %arg13[%c0_107, %c0_108], %284 {strides = array<i32>} : memref<12x64xf32, #tpu.memory_space<vmem>>, vector<12x32xf32>,
    %c0_109 = arith.constant 0 : index
    %c32_110 = arith.constant 32 : index
    %286 = vector.load %arg13[%c0_109, %c32_110] : memref<12x64xf32, #tpu.memory_space<vmem>>, vector<12x32xf32>
    tpu.vector_store %arg13[%c0_109, %c32_110], %273 {strides = array<i32>} : memref<12x64xf32, #tpu.memory_space<vmem>>, vector<12x32xf32>,
    %c0_111 = arith.constant 0 : index
    %c0_112 = arith.constant 0 : index
    %287 = vector.load %arg13[%c0_111, %c0_112] : memref<12x64xf32, #tpu.memory_space<vmem>>, vector<12x64xf32>
    %288 = vector.extract_strided_slice %287 {offsets = [0, 32], sizes = [12, 32], strides = [1, 1]} : vector<12x64xf32> to vector<12x32xf32>
    %c0_113 = arith.constant 0 : index
    %c0_114 = arith.constant 0 : index
    %289 = vector.load %arg7[%c0_113, %c0_114] : memref<64x128xf32, #tpu.memory_space<vmem>>, vector<64x128xf32>
    %cst_115 = arith.constant dense<0.000000e+00> : vector<12x128xf32>
    %290 = tpu.matmul %287, %289, %cst_115 {dimension_numbers = #tpu.dot_dimension_numbers<[1], [0], [0], [1], [0, 0, 1, 1], [], []>} : vector<12x64xf32>, vector<64x128xf32>, vector<12x128xf32> -> vector<12x128xf32>
    %c0_116 = arith.constant 0 : index
    %c0_117 = arith.constant 0 : index
    %291 = vector.load %arg8[%c0_116, %c0_117] : memref<1x128xf32, #tpu.memory_space<vmem>>, vector<1x128xf32>
    %292 = vector.broadcast %291 : vector<1x128xf32> to vector<12x128xf32>
    %293 = arith.addf %290, %292 : vector<12x128xf32>
    %294 = vector.extract_strided_slice %293 {offsets = [0, 0], sizes = [12, 32], strides = [1, 1]} : vector<12x128xf32> to vector<12x32xf32>
    %295 = arith.negf %294 : vector<12x32xf32>
    %296 = math.exp %295 : vector<12x32xf32>
    %cst_118 = arith.constant 1.000000e+00 : f32
    %297 = vector.broadcast %cst_118 : f32 to vector<12x32xf32>
    %298 = arith.addf %297, %296 : vector<12x32xf32>
    %299 = arith.divf %297, %298 : vector<12x32xf32>
    %300 = vector.extract_strided_slice %293 {offsets = [0, 32], sizes = [12, 32], strides = [1, 1]} : vector<12x128xf32> to vector<12x32xf32>
    %301 = arith.negf %300 : vector<12x32xf32>
    %302 = math.exp %301 : vector<12x32xf32>
    %cst_119 = arith.constant 1.000000e+00 : f32
    %303 = vector.broadcast %cst_119 : f32 to vector<12x32xf32>
    %304 = arith.addf %303, %302 : vector<12x32xf32>
    %305 = arith.divf %303, %304 : vector<12x32xf32>
    %306 = vector.extract_strided_slice %293 {offsets = [0, 64], sizes = [12, 32], strides = [1, 1]} : vector<12x128xf32> to vector<12x32xf32>
    %307 = vector.extract_strided_slice %293 {offsets = [0, 96], sizes = [12, 32], strides = [1, 1]} : vector<12x128xf32> to vector<12x32xf32>
    %308 = arith.mulf %299, %307 : vector<12x32xf32>
    %309 = arith.addf %306, %308 : vector<12x32xf32>
    %310 = math.tanh %309 : vector<12x32xf32>
    %cst_120 = arith.constant 1.000000e+00 : f32
    %311 = vector.broadcast %cst_120 : f32 to vector<12x32xf32>
    %312 = arith.subf %311, %305 : vector<12x32xf32>
    %313 = arith.mulf %312, %310 : vector<12x32xf32>
    %314 = arith.mulf %305, %288 : vector<12x32xf32>
    %315 = arith.addf %313, %314 : vector<12x32xf32>
    %c0_121 = arith.constant 0 : index
    %c0_122 = arith.constant 0 : index
    %316 = vector.load %arg9[%c0_121, %c0_122] : memref<32x36xf32, #tpu.memory_space<vmem>>, vector<32x36xf32>
    %cst_123 = arith.constant dense<0.000000e+00> : vector<12x36xf32>
    %317 = tpu.matmul %315, %316, %cst_123 {dimension_numbers = #tpu.dot_dimension_numbers<[1], [0], [0], [1], [0, 0, 1, 1], [], []>} : vector<12x32xf32>, vector<32x36xf32>, vector<12x36xf32> -> vector<12x36xf32>
    %c0_124 = arith.constant 0 : index
    %c0_125 = arith.constant 0 : index
    %318 = vector.load %arg10[%c0_124, %c0_125] : memref<1x36xf32, #tpu.memory_space<vmem>>, vector<1x36xf32>
    %319 = vector.broadcast %318 : vector<1x36xf32> to vector<12x36xf32>
    %320 = arith.addf %317, %319 : vector<12x36xf32>
    %321 = vector.extract_strided_slice %320 {offsets = [0, 32], sizes = [12, 4], strides = [1, 1]} : vector<12x36xf32> to vector<12x4xf32>
    %322 = math.tanh %321 : vector<12x4xf32>
    %c0_126 = arith.constant 0 : index
    %c4_127 = arith.constant 4 : index
    %323 = vector.load %arg11[%c0_126, %c4_127] : memref<12x16xf32, #tpu.memory_space<vmem>>, vector<12x4xf32>
    tpu.vector_store %arg11[%c0_126, %c4_127], %322 {strides = array<i32>} : memref<12x16xf32, #tpu.memory_space<vmem>>, vector<12x4xf32>,
    %324 = vector.extract_strided_slice %320 {offsets = [0, 0], sizes = [12, 32], strides = [1, 1]} : vector<12x36xf32> to vector<12x32xf32>
    %cst_128 = arith.constant 0.000000e+00 : f32
    %325 = vector.broadcast %cst_128 : f32 to vector<12x32xf32>
    %326 = arith.maximumf %324, %325 : vector<12x32xf32>
    %c0_129 = arith.constant 0 : index
    %c0_130 = arith.constant 0 : index
    %327 = vector.load %arg13[%c0_129, %c0_130] : memref<12x64xf32, #tpu.memory_space<vmem>>, vector<12x32xf32>
    tpu.vector_store %arg13[%c0_129, %c0_130], %326 {strides = array<i32>} : memref<12x64xf32, #tpu.memory_space<vmem>>, vector<12x32xf32>,
    %c0_131 = arith.constant 0 : index
    %c32_132 = arith.constant 32 : index
    %328 = vector.load %arg13[%c0_131, %c32_132] : memref<12x64xf32, #tpu.memory_space<vmem>>, vector<12x32xf32>
    tpu.vector_store %arg13[%c0_131, %c32_132], %315 {strides = array<i32>} : memref<12x64xf32, #tpu.memory_space<vmem>>, vector<12x32xf32>,
    %c0_133 = arith.constant 0 : index
    %c0_134 = arith.constant 0 : index
    %329 = vector.load %arg13[%c0_133, %c0_134] : memref<12x64xf32, #tpu.memory_space<vmem>>, vector<12x64xf32>
    %330 = vector.extract_strided_slice %329 {offsets = [0, 32], sizes = [12, 32], strides = [1, 1]} : vector<12x64xf32> to vector<12x32xf32>
    %c0_135 = arith.constant 0 : index
    %c0_136 = arith.constant 0 : index
    %331 = vector.load %arg7[%c0_135, %c0_136] : memref<64x128xf32, #tpu.memory_space<vmem>>, vector<64x128xf32>
    %cst_137 = arith.constant dense<0.000000e+00> : vector<12x128xf32>
    %332 = tpu.matmul %329, %331, %cst_137 {dimension_numbers = #tpu.dot_dimension_numbers<[1], [0], [0], [1], [0, 0, 1, 1], [], []>} : vector<12x64xf32>, vector<64x128xf32>, vector<12x128xf32> -> vector<12x128xf32>
    %c0_138 = arith.constant 0 : index
    %c0_139 = arith.constant 0 : index
    %333 = vector.load %arg8[%c0_138, %c0_139] : memref<1x128xf32, #tpu.memory_space<vmem>>, vector<1x128xf32>
    %334 = vector.broadcast %333 : vector<1x128xf32> to vector<12x128xf32>
    %335 = arith.addf %332, %334 : vector<12x128xf32>
    %336 = vector.extract_strided_slice %335 {offsets = [0, 0], sizes = [12, 32], strides = [1, 1]} : vector<12x128xf32> to vector<12x32xf32>
    %337 = arith.negf %336 : vector<12x32xf32>
    %338 = math.exp %337 : vector<12x32xf32>
    %cst_140 = arith.constant 1.000000e+00 : f32
    %339 = vector.broadcast %cst_140 : f32 to vector<12x32xf32>
    %340 = arith.addf %339, %338 : vector<12x32xf32>
    %341 = arith.divf %339, %340 : vector<12x32xf32>
    %342 = vector.extract_strided_slice %335 {offsets = [0, 32], sizes = [12, 32], strides = [1, 1]} : vector<12x128xf32> to vector<12x32xf32>
    %343 = arith.negf %342 : vector<12x32xf32>
    %344 = math.exp %343 : vector<12x32xf32>
    %cst_141 = arith.constant 1.000000e+00 : f32
    %345 = vector.broadcast %cst_141 : f32 to vector<12x32xf32>
    %346 = arith.addf %345, %344 : vector<12x32xf32>
    %347 = arith.divf %345, %346 : vector<12x32xf32>
    %348 = vector.extract_strided_slice %335 {offsets = [0, 64], sizes = [12, 32], strides = [1, 1]} : vector<12x128xf32> to vector<12x32xf32>
    %349 = vector.extract_strided_slice %335 {offsets = [0, 96], sizes = [12, 32], strides = [1, 1]} : vector<12x128xf32> to vector<12x32xf32>
    %350 = arith.mulf %341, %349 : vector<12x32xf32>
    %351 = arith.addf %348, %350 : vector<12x32xf32>
    %352 = math.tanh %351 : vector<12x32xf32>
    %cst_142 = arith.constant 1.000000e+00 : f32
    %353 = vector.broadcast %cst_142 : f32 to vector<12x32xf32>
    %354 = arith.subf %353, %347 : vector<12x32xf32>
    %355 = arith.mulf %354, %352 : vector<12x32xf32>
    %356 = arith.mulf %347, %330 : vector<12x32xf32>
    %357 = arith.addf %355, %356 : vector<12x32xf32>
    %c0_143 = arith.constant 0 : index
    %c0_144 = arith.constant 0 : index
    %358 = vector.load %arg9[%c0_143, %c0_144] : memref<32x36xf32, #tpu.memory_space<vmem>>, vector<32x36xf32>
    %cst_145 = arith.constant dense<0.000000e+00> : vector<12x36xf32>
    %359 = tpu.matmul %357, %358, %cst_145 {dimension_numbers = #tpu.dot_dimension_numbers<[1], [0], [0], [1], [0, 0, 1, 1], [], []>} : vector<12x32xf32>, vector<32x36xf32>, vector<12x36xf32> -> vector<12x36xf32>
    %c0_146 = arith.constant 0 : index
    %c0_147 = arith.constant 0 : index
    %360 = vector.load %arg10[%c0_146, %c0_147] : memref<1x36xf32, #tpu.memory_space<vmem>>, vector<1x36xf32>
    %361 = vector.broadcast %360 : vector<1x36xf32> to vector<12x36xf32>
    %362 = arith.addf %359, %361 : vector<12x36xf32>
    %363 = vector.extract_strided_slice %362 {offsets = [0, 32], sizes = [12, 4], strides = [1, 1]} : vector<12x36xf32> to vector<12x4xf32>
    %364 = math.tanh %363 : vector<12x4xf32>
    %c0_148 = arith.constant 0 : index
    %c8_149 = arith.constant 8 : index
    %365 = vector.load %arg11[%c0_148, %c8_149] : memref<12x16xf32, #tpu.memory_space<vmem>>, vector<12x4xf32>
    tpu.vector_store %arg11[%c0_148, %c8_149], %364 {strides = array<i32>} : memref<12x16xf32, #tpu.memory_space<vmem>>, vector<12x4xf32>,
    %366 = vector.extract_strided_slice %362 {offsets = [0, 0], sizes = [12, 32], strides = [1, 1]} : vector<12x36xf32> to vector<12x32xf32>
    %cst_150 = arith.constant 0.000000e+00 : f32
    %367 = vector.broadcast %cst_150 : f32 to vector<12x32xf32>
    %368 = arith.maximumf %366, %367 : vector<12x32xf32>
    %c0_151 = arith.constant 0 : index
    %c0_152 = arith.constant 0 : index
    %369 = vector.load %arg13[%c0_151, %c0_152] : memref<12x64xf32, #tpu.memory_space<vmem>>, vector<12x32xf32>
    tpu.vector_store %arg13[%c0_151, %c0_152], %368 {strides = array<i32>} : memref<12x64xf32, #tpu.memory_space<vmem>>, vector<12x32xf32>,
    %c0_153 = arith.constant 0 : index
    %c32_154 = arith.constant 32 : index
    %370 = vector.load %arg13[%c0_153, %c32_154] : memref<12x64xf32, #tpu.memory_space<vmem>>, vector<12x32xf32>
    tpu.vector_store %arg13[%c0_153, %c32_154], %357 {strides = array<i32>} : memref<12x64xf32, #tpu.memory_space<vmem>>, vector<12x32xf32>,
    %c0_155 = arith.constant 0 : index
    %c0_156 = arith.constant 0 : index
    %371 = vector.load %arg13[%c0_155, %c0_156] : memref<12x64xf32, #tpu.memory_space<vmem>>, vector<12x64xf32>
    %372 = vector.extract_strided_slice %371 {offsets = [0, 32], sizes = [12, 32], strides = [1, 1]} : vector<12x64xf32> to vector<12x32xf32>
    %c0_157 = arith.constant 0 : index
    %c0_158 = arith.constant 0 : index
    %373 = vector.load %arg7[%c0_157, %c0_158] : memref<64x128xf32, #tpu.memory_space<vmem>>, vector<64x128xf32>
    %cst_159 = arith.constant dense<0.000000e+00> : vector<12x128xf32>
    %374 = tpu.matmul %371, %373, %cst_159 {dimension_numbers = #tpu.dot_dimension_numbers<[1], [0], [0], [1], [0, 0, 1, 1], [], []>} : vector<12x64xf32>, vector<64x128xf32>, vector<12x128xf32> -> vector<12x128xf32>
    %c0_160 = arith.constant 0 : index
    %c0_161 = arith.constant 0 : index
    %375 = vector.load %arg8[%c0_160, %c0_161] : memref<1x128xf32, #tpu.memory_space<vmem>>, vector<1x128xf32>
    %376 = vector.broadcast %375 : vector<1x128xf32> to vector<12x128xf32>
    %377 = arith.addf %374, %376 : vector<12x128xf32>
    %378 = vector.extract_strided_slice %377 {offsets = [0, 0], sizes = [12, 32], strides = [1, 1]} : vector<12x128xf32> to vector<12x32xf32>
    %379 = arith.negf %378 : vector<12x32xf32>
    %380 = math.exp %379 : vector<12x32xf32>
    %cst_162 = arith.constant 1.000000e+00 : f32
    %381 = vector.broadcast %cst_162 : f32 to vector<12x32xf32>
    %382 = arith.addf %381, %380 : vector<12x32xf32>
    %383 = arith.divf %381, %382 : vector<12x32xf32>
    %384 = vector.extract_strided_slice %377 {offsets = [0, 32], sizes = [12, 32], strides = [1, 1]} : vector<12x128xf32> to vector<12x32xf32>
    %385 = arith.negf %384 : vector<12x32xf32>
    %386 = math.exp %385 : vector<12x32xf32>
    %cst_163 = arith.constant 1.000000e+00 : f32
    %387 = vector.broadcast %cst_163 : f32 to vector<12x32xf32>
    %388 = arith.addf %387, %386 : vector<12x32xf32>
    %389 = arith.divf %387, %388 : vector<12x32xf32>
    %390 = vector.extract_strided_slice %377 {offsets = [0, 64], sizes = [12, 32], strides = [1, 1]} : vector<12x128xf32> to vector<12x32xf32>
    %391 = vector.extract_strided_slice %377 {offsets = [0, 96], sizes = [12, 32], strides = [1, 1]} : vector<12x128xf32> to vector<12x32xf32>
    %392 = arith.mulf %383, %391 : vector<12x32xf32>
    %393 = arith.addf %390, %392 : vector<12x32xf32>
    %394 = math.tanh %393 : vector<12x32xf32>
    %cst_164 = arith.constant 1.000000e+00 : f32
    %395 = vector.broadcast %cst_164 : f32 to vector<12x32xf32>
    %396 = arith.subf %395, %389 : vector<12x32xf32>
    %397 = arith.mulf %396, %394 : vector<12x32xf32>
    %398 = arith.mulf %389, %372 : vector<12x32xf32>
    %399 = arith.addf %397, %398 : vector<12x32xf32>
    %c0_165 = arith.constant 0 : index
    %c0_166 = arith.constant 0 : index
    %400 = vector.load %arg9[%c0_165, %c0_166] : memref<32x36xf32, #tpu.memory_space<vmem>>, vector<32x36xf32>
    %cst_167 = arith.constant dense<0.000000e+00> : vector<12x36xf32>
    %401 = tpu.matmul %399, %400, %cst_167 {dimension_numbers = #tpu.dot_dimension_numbers<[1], [0], [0], [1], [0, 0, 1, 1], [], []>} : vector<12x32xf32>, vector<32x36xf32>, vector<12x36xf32> -> vector<12x36xf32>
    %c0_168 = arith.constant 0 : index
    %c0_169 = arith.constant 0 : index
    %402 = vector.load %arg10[%c0_168, %c0_169] : memref<1x36xf32, #tpu.memory_space<vmem>>, vector<1x36xf32>
    %403 = vector.broadcast %402 : vector<1x36xf32> to vector<12x36xf32>
    %404 = arith.addf %401, %403 : vector<12x36xf32>
    %405 = vector.extract_strided_slice %404 {offsets = [0, 32], sizes = [12, 4], strides = [1, 1]} : vector<12x36xf32> to vector<12x4xf32>
    %406 = math.tanh %405 : vector<12x4xf32>
    %c0_170 = arith.constant 0 : index
    %c12 = arith.constant 12 : index
    %407 = vector.load %arg11[%c0_170, %c12] : memref<12x16xf32, #tpu.memory_space<vmem>>, vector<12x4xf32>
    tpu.vector_store %arg11[%c0_170, %c12], %406 {strides = array<i32>} : memref<12x16xf32, #tpu.memory_space<vmem>>, vector<12x4xf32>,
    return
  }
}

</mosaic_0001>

<llo_original>
// kernel: tpu_custom_call.1
$region0: #{tpu_custom_call.1}
  #allocation0 [shape = 'u32[]', space=smem, size = 0x4, offset = 0x4, fixed_abs, tag = 'smem constant byte address 0x4 - core index']
  #allocation1 [shape = 'u32[72,128]{1,0:T(1,128)}', space=vmem, size = 0x9000, scoped, tag = 'internal scratch']
  #allocation2 [shape = 'f32[12,192]{1,0:T(8,128)}', space=vmem, size = 0x4000, scoped, tag = 'scratch operand']
  #allocation3 [shape = 'f32[12,64]{1,0:T(8,128)}', space=vmem, size = 0x2000, scoped, tag = 'scratch operand']
  %s0 = inlined_call_operand.hbm [shape: f32[12,54], index: 0, kind: input, shape index: {}]
  %s1 = inlined_call_operand.hbm [shape: f32[54,64], index: 1, kind: input, shape index: {}]
  %s2 = inlined_call_operand.hbm [shape: f32[1,64], index: 2, kind: input, shape index: {}]
  %s3 = inlined_call_operand.hbm [shape: f32[64,192], index: 3, kind: input, shape index: {}]
  %s4 = inlined_call_operand.vmem [shape: f32[1,192], index: 4, kind: input, shape index: {}]
  %s5 = inlined_call_operand.hbm [shape: f32[64,192], index: 5, kind: input, shape index: {}]
  %s6 = inlined_call_operand.vmem [shape: f32[1,192], index: 6, kind: input, shape index: {}]
  %s7 = inlined_call_operand.hbm [shape: f32[64,128], index: 7, kind: input, shape index: {}]
  %s8 = inlined_call_operand.vmem [shape: f32[1,128], index: 8, kind: input, shape index: {}]
  %s9 = inlined_call_operand.hbm [shape: f32[32,36], index: 9, kind: input, shape index: {}]
  %s10 = inlined_call_operand.vmem [shape: f32[1,36], index: 10, kind: input, shape index: {}]
  %s11 = inlined_call_operand.hbm [shape: f32[12,16], index: 11, kind: output, shape index: {}]
  %s12 = sld [smem:[#allocation0]]
  $region82: #{tpu_custom_call.1} parent=0
    _
  %s14 = ssub.s32 1, %s12
  %s15 = scalar_select 0, %s14, %s12
  $region1: #{tpu_custom_call.1} parent=0
    #allocation4 [shape = 'u8[8192]{0}', space=vmem, size = 0x2000, scoped, tag = 'input window, operand 0, single buffered']
    #allocation5 [shape = 's32[1]{0}', space=sflag, size = 0x4, scoped, tag = 'scoped memory for tpu_custom_call.1']
    #allocation6 [shape = 's32[1]{0}', space=sflag, size = 0x4, scoped, tag = 'scoped memory for tpu_custom_call.1']
    #allocation7 [shape = 'u8[28672]{0}', space=vmem, size = 0x7000, scoped, tag = 'input window, operand 1, single buffered']
    #allocation8 [shape = 's32[1]{0}', space=sflag, size = 0x4, scoped, tag = 'scoped memory for tpu_custom_call.1']
    #allocation9 [shape = 'u8[512]{0}', space=vmem, size = 0x400, scoped, tag = 'input window, operand 2, single buffered']
    #allocation10 [shape = 'u8[65536]{0}', space=vmem, size = 0x10000, scoped, tag = 'input window, operand 3, single buffered']
    #allocation11 [shape = 's32[1]{0}', space=sflag, size = 0x4, scoped, tag = 'scoped memory for tpu_custom_call.1']
    #allocation12 [shape = 'u8[65536]{0}', space=vmem, size = 0x10000, scoped, tag = 'input window, operand 5, single buffered']
    #allocation13 [shape = 'u8[32768]{0}', space=vmem, size = 0x8000, scoped, tag = 'input window, operand 7, single buffered']
    #allocation14 [shape = 's32[1]{0}', space=sflag, size = 0x4, scoped, tag = 'scoped memory for tpu_custom_call.1']
    #allocation15 [shape = 'u8[16384]{0}', space=vmem, size = 0x4000, scoped, tag = 'input window, operand 9, single buffered']
    #allocation16 [shape = 'u8[8192]{0}', space=vmem, size = 0x2000, scoped, tag = 'output window, operand 0, single buffered']
    %16 = vsyncpa [#allocation5], 0
    %17 = vsyncpa [#allocation8], 0
    %18 = vsyncpa [#allocation11], 0
    %19 = vsyncpa [#allocation14], 0
    %20 = vsyncpa [#allocation6], 0
    // Predicated region
    $region2: #{tpu_custom_call.1} parent=1 // pred_check
      _
    $region3: #{tpu_custom_call.1} parent=1 // pred_check_branch
      %22 = sbr.rel (0) target = $region5
    $region4: #{tpu_custom_call.1} parent=1 // pred_region
      %24 = vsyncadd [#allocation5], 0
      %s25 = sshll.u32 %s0, 4
      %s26 = int_to_ptr.hbm [resolvable:$true] %s25
      %s27 = sshll.u32 [#allocation4], 4
      %s28 = int_to_ptr.vmem [resolvable:$true] %s27
      %33 = dma.hbm_to_vmem [thread:$0]  %s26, 256, %s28, [#allocation5], 128, 128, 8
    $region5: #{tpu_custom_call.1} parent=1 // pred_fallthru
      _
    // Predicated region
    $region6: #{tpu_custom_call.1} parent=1 // pred_check
      _
    $region7: #{tpu_custom_call.1} parent=1 // pred_check_branch
      %35 = sbr.rel (0) target = $region9
    $region8: #{tpu_custom_call.1} parent=1 // pred_region
      %37 = vsyncadd [#allocation8], 0
      %s38 = sshll.u32 %s1, 4
      %s39 = int_to_ptr.hbm [resolvable:$true] %s38
      %s40 = sshll.u32 [#allocation7], 4
      %s41 = int_to_ptr.vmem [resolvable:$true] %s40
      %46 = dma.hbm_to_vmem [thread:$0]  %s39, 896, %s41, [#allocation8], 128, 128, 8
    $region9: #{tpu_custom_call.1} parent=1 // pred_fallthru
      _
    // Predicated region
    $region10: #{tpu_custom_call.1} parent=1 // pred_check
      _
    $region11: #{tpu_custom_call.1} parent=1 // pred_check_branch
      %48 = sbr.rel (0) target = $region13
    $region12: #{tpu_custom_call.1} parent=1 // pred_region
      %50 = vsyncadd [#allocation8], 0
      %s52 = sshll.u32 %s2, 4
      %s53 = int_to_ptr.hbm [resolvable:$true] %s52
      %s54 = sshll.u32 [#allocation9], 4
      %s55 = int_to_ptr.vmem [resolvable:$true] %s54
      %57 = dma.hbm_to_vmem [thread:$0]  %s53, 16, %s55, [#allocation8]
    $region13: #{tpu_custom_call.1} parent=1 // pred_fallthru
      _
    // Predicated region
    $region14: #{tpu_custom_call.1} parent=1 // pred_check
      _
    $region15: #{tpu_custom_call.1} parent=1 // pred_check_branch
      %59 = sbr.rel (0) target = $region17
    $region16: #{tpu_custom_call.1} parent=1 // pred_region
      %61 = vsyncadd [#allocation11], 0
      %s62 = sshll.u32 %s3, 4
      %s63 = int_to_ptr.hbm [resolvable:$true] %s62
      %s64 = sshll.u32 [#allocation10], 4
      %s65 = int_to_ptr.vmem [resolvable:$true] %s64
      %70 = dma.hbm_to_vmem [thread:$0]  %s63, 2048, %s65, [#allocation11], 256, 256, 16
    $region17: #{tpu_custom_call.1} parent=1 // pred_fallthru
      _
    // Predicated region
    $region18: #{tpu_custom_call.1} parent=1 // pred_check
      _
    $region19: #{tpu_custom_call.1} parent=1 // pred_check_branch
      %72 = sbr.rel (0) target = $region21
    $region20: #{tpu_custom_call.1} parent=1 // pred_region
      _
    $region21: #{tpu_custom_call.1} parent=1 // pred_fallthru
      _
    // Predicated region
    $region22: #{tpu_custom_call.1} parent=1 // pred_check
      _
    $region23: #{tpu_custom_call.1} parent=1 // pred_check_branch
      %74 = sbr.rel (0) target = $region25
    $region24: #{tpu_custom_call.1} parent=1 // pred_region
      %76 = vsyncadd [#allocation11], 0
      %s77 = sshll.u32 %s5, 4
      %s78 = int_to_ptr.hbm [resolvable:$true] %s77
      %s79 = sshll.u32 [#allocation12], 4
      %s80 = int_to_ptr.vmem [resolvable:$true] %s79
      %85 = dma.hbm_to_vmem [thread:$0]  %s78, 2048, %s80, [#allocation11], 256, 256, 16
    $region25: #{tpu_custom_call.1} parent=1 // pred_fallthru
      _
    // Predicated region
    $region26: #{tpu_custom_call.1} parent=1 // pred_check
      _
    $region27: #{tpu_custom_call.1} parent=1 // pred_check_branch
      %87 = sbr.rel (0) target = $region29
    $region28: #{tpu_custom_call.1} parent=1 // pred_region
      _
    $region29: #{tpu_custom_call.1} parent=1 // pred_fallthru
      _
    // Predicated region
    $region30: #{tpu_custom_call.1} parent=1 // pred_check
      _
    $region31: #{tpu_custom_call.1} parent=1 // pred_check_branch
      %89 = sbr.rel (0) target = $region33
    $region32: #{tpu_custom_call.1} parent=1 // pred_region
      %91 = vsyncadd [#allocation14], 0
      %s92 = sshll.u32 %s7, 4
      %s93 = int_to_ptr.hbm [resolvable:$true] %s92
      %s94 = sshll.u32 [#allocation13], 4
      %s95 = int_to_ptr.vmem [resolvable:$true] %s94
      %100 = dma.hbm_to_vmem [thread:$0]  %s93, 1024, %s95, [#allocation14], 128, 128, 8
    $region33: #{tpu_custom_call.1} parent=1 // pred_fallthru
      _
    // Predicated region
    $region34: #{tpu_custom_call.1} parent=1 // pred_check
      _
    $region35: #{tpu_custom_call.1} parent=1 // pred_check_branch
      %102 = sbr.rel (0) target = $region37
    $region36: #{tpu_custom_call.1} parent=1 // pred_region
      _
    $region37: #{tpu_custom_call.1} parent=1 // pred_fallthru
      _
    // Predicated region
    $region38: #{tpu_custom_call.1} parent=1 // pred_check
      _
    $region39: #{tpu_custom_call.1} parent=1 // pred_check_branch
      %104 = sbr.rel (0) target = $region41
    $region40: #{tpu_custom_call.1} parent=1 // pred_region
      %106 = vsyncadd [#allocation14], 0
      %s107 = sshll.u32 %s9, 4
      %s108 = int_to_ptr.hbm [resolvable:$true] %s107
      %s109 = sshll.u32 [#allocation15], 4
      %s110 = int_to_ptr.vmem [resolvable:$true] %s109
      %115 = dma.hbm_to_vmem [thread:$0]  %s108, 512, %s110, [#allocation14], 128, 128, 8
    $region41: #{tpu_custom_call.1} parent=1 // pred_fallthru
      _
    // Predicated region
    $region42: #{tpu_custom_call.1} parent=1 // pred_check
      _
    $region43: #{tpu_custom_call.1} parent=1 // pred_check_branch
      %117 = sbr.rel (0) target = $region45
    $region44: #{tpu_custom_call.1} parent=1 // pred_region
      _
    $region45: #{tpu_custom_call.1} parent=1 // pred_fallthru
      _
    // Predicated region
    $region46: #{tpu_custom_call.1} parent=1 // pred_check
      _
    $region47: #{tpu_custom_call.1} parent=1 // pred_check_branch
      %119 = sbr.rel (0) target = $region49
    $region48: #{tpu_custom_call.1} parent=1 // pred_region
      %121 = dma.done [#allocation5], 256
    $region49: #{tpu_custom_call.1} parent=1 // pred_fallthru
      _
    // Predicated region
    $region50: #{tpu_custom_call.1} parent=1 // pred_check
      _
    $region51: #{tpu_custom_call.1} parent=1 // pred_check_branch
      %123 = sbr.rel (0) target = $region53
    $region52: #{tpu_custom_call.1} parent=1 // pred_region
      %125 = dma.done [#allocation8], 896
    $region53: #{tpu_custom_call.1} parent=1 // pred_fallthru
      _
    // Predicated region
    $region54: #{tpu_custom_call.1} parent=1 // pred_check
      _
    $region55: #{tpu_custom_call.1} parent=1 // pred_check_branch
      %127 = sbr.rel (0) target = $region57
    $region56: #{tpu_custom_call.1} parent=1 // pred_region
      %129 = dma.done [#allocation8], 16
    $region57: #{tpu_custom_call.1} parent=1 // pred_fallthru
      _
    // Predicated region
    $region58: #{tpu_custom_call.1} parent=1 // pred_check
      _
    $region59: #{tpu_custom_call.1} parent=1 // pred_check_branch
      %131 = sbr.rel (0) target = $region61
    $region60: #{tpu_custom_call.1} parent=1 // pred_region
      %133 = dma.done [#allocation11], 2048
    $region61: #{tpu_custom_call.1} parent=1 // pred_fallthru
      _
    // Predicated region
    $region62: #{tpu_custom_call.1} parent=1 // pred_check
      _
    $region63: #{tpu_custom_call.1} parent=1 // pred_check_branch
      %135 = sbr.rel (0) target = $region65
    $region64: #{tpu_custom_call.1} parent=1 // pred_region
      %137 = dma.done [#allocation11], 2048
    $region65: #{tpu_custom_call.1} parent=1 // pred_fallthru
      _
    // Predicated region
    $region66: #{tpu_custom_call.1} parent=1 // pred_check
      _
    $region67: #{tpu_custom_call.1} parent=1 // pred_check_branch
      %139 = sbr.rel (0) target = $region69
    $region68: #{tpu_custom_call.1} parent=1 // pred_region
      %141 = dma.done [#allocation14], 1024
    $region69: #{tpu_custom_call.1} parent=1 // pred_fallthru
      _
    // Predicated region
    $region70: #{tpu_custom_call.1} parent=1 // pred_check
      _
    $region71: #{tpu_custom_call.1} parent=1 // pred_check_branch
      %143 = sbr.rel (0) target = $region73
    $region72: #{tpu_custom_call.1} parent=1 // pred_region
      %145 = dma.done [#allocation14], 512
    $region73: #{tpu_custom_call.1} parent=1 // pred_fallthru
      _
    %v146 = vld [vmem:[#allocation4] sm:$0xff]
    %v147 = vld [vmem:[#allocation4 + $0x8] sm:$0xf]
    %v148 = vld [vmem:[#allocation7] sm:$0xff]
    %v149 = vld [vmem:[#allocation7 + $0x8] sm:$0xff]
    %v150 = vld [vmem:[#allocation7 + $0x10] sm:$0xff]
    %v151 = vld [vmem:[#allocation7 + $0x18] sm:$0xff]
    %v152 = vld [vmem:[#allocation7 + $0x20] sm:$0xff]
    %v153 = vld [vmem:[#allocation7 + $0x28] sm:$0xff]
    %v154 = vld [vmem:[#allocation7 + $0x30] sm:$0x3f]
    %v155 = vld [vmem:[#allocation9] sm:$0x1]
    %v157 = vperm.slane %v155, 0
    %vm159 = vcmask 441344
    %v161 = vsel %vm159, %v146, 0
    %v164 = vsel %vm159, %v147, 0
    %vm166 = vcmask 1045504
    %v168 = vsel %vm166, %v154, 0
    %170 = vmatpush.msra.mxu0 0.0
    %171 = vmatpush.msra.mxu0 0.0
    %172 = vmatpush.msra.mxu0 0.0
    %173 = vmatpush.msra.mxu0 0.0
    %174 = vmatpush.msra.mxu0 0.0
    %175 = vmatpush.msra.mxu0 0.0
    %176 = vmatpush.msra.mxu0 0.0
    %177 = vmatpush.msra.mxu0 0.0
    %178 = vmatpush.msra.mxu0 0.0
    %179 = vmatpush.msra.mxu0 %v168
    %180 = vmatpush.msra.mxu0 %v153
    %181 = vmatpush.msra.mxu0 %v152
    %182 = vmatpush.msra.mxu0 %v151
    %183 = vmatpush.msra.mxu0 %v150
    %184 = vmatpush.msra.mxu0 %v149
    %185 = vmatpush.msra.mxu0 %v148
    %186 = vmatmul.f32.gmra.mxu0 %v161
    %v187 = vpop.f32.mrf.mxu0
    %v188 = vadd.f32 %v157, %v187
    %189 = vmatmul.f32.gmra.mxu0 %v164
    %v190 = vpop.f32.mrf.mxu0
    %v191 = vadd.f32 %v157, %v190
    %192 = vdwg.mxu0
    %v193 = vmax.f32 %v188, 0.0
    %v194 = vmax.f32 %v191, 0.0
    %v195 = vld [vmem:[#allocation10] sm:$0xff]
    %v196 = vld [vmem:[#allocation10 + $0x8] sm:$0xff]
    %v197 = vld [vmem:[#allocation10 + $0x10] sm:$0xff]
    %v198 = vld [vmem:[#allocation10 + $0x18] sm:$0xff]
    %v199 = vld [vmem:[#allocation10 + $0x20] sm:$0xff]
    %v200 = vld [vmem:[#allocation10 + $0x28] sm:$0xff]
    %v201 = vld [vmem:[#allocation10 + $0x30] sm:$0xff]
    %v202 = vld [vmem:[#allocation10 + $0x38] sm:$0xff]
    %v203 = vld [vmem:[#allocation10 + $0x40] sm:$0xff]
    %v204 = vld [vmem:[#allocation10 + $0x48] sm:$0xff]
    %v205 = vld [vmem:[#allocation10 + $0x50] sm:$0xff]
    %v206 = vld [vmem:[#allocation10 + $0x58] sm:$0xff]
    %v207 = vld [vmem:[#allocation10 + $0x60] sm:$0xff]
    %v208 = vld [vmem:[#allocation10 + $0x68] sm:$0xff]
    %v209 = vld [vmem:[#allocation10 + $0x70] sm:$0xff]
    %v210 = vld [vmem:[#allocation10 + $0x78] sm:$0xff]
    %v211 = vld [vmem:[%s4] sm:$0x3]
    %v213 = vperm.slane %v211, 0
    %v214 = vperm.slane %v211, 1
    %vm217 = vcmask 523264
    %v219 = vsel %vm217, %v193, 0
    %v222 = vsel %vm217, %v194, 0
    %224 = vmatpush.msra.mxu0 0.0
    %225 = vmatpush.msra.mxu0 0.0
    %226 = vmatpush.msra.mxu0 0.0
    %227 = vmatpush.msra.mxu0 0.0
    %228 = vmatpush.msra.mxu0 0.0
    %229 = vmatpush.msra.mxu0 0.0
    %230 = vmatpush.msra.mxu0 0.0
    %231 = vmatpush.msra.mxu0 0.0
    %232 = vmatpush.msra.mxu0 %v209
    %233 = vmatpush.msra.mxu0 %v207
    %234 = vmatpush.msra.mxu0 %v205
    %235 = vmatpush.msra.mxu0 %v203
    %236 = vmatpush.msra.mxu0 %v201
    %237 = vmatpush.msra.mxu0 %v199
    %238 = vmatpush.msra.mxu0 %v197
    %239 = vmatpush.msra.mxu0 %v195
    %240 = vmatmul.f32.gmra.mxu0 %v219
    %v241 = vpop.f32.mrf.mxu0
    %v242 = vadd.f32 %v213, %v241
    %243 = vmatmul.f32.gmra.mxu0 %v222
    %v244 = vpop.f32.mrf.mxu0
    %v245 = vadd.f32 %v213, %v244
    %246 = vdwg.mxu0
    %247 = vmatpush.msra.mxu0 0.0
    %248 = vmatpush.msra.mxu0 0.0
    %249 = vmatpush.msra.mxu0 0.0
    %250 = vmatpush.msra.mxu0 0.0
    %251 = vmatpush.msra.mxu0 0.0
    %252 = vmatpush.msra.mxu0 0.0
    %253 = vmatpush.msra.mxu0 0.0
    %254 = vmatpush.msra.mxu0 0.0
    %255 = vmatpush.msra.mxu0 %v210
    %256 = vmatpush.msra.mxu0 %v208
    %257 = vmatpush.msra.mxu0 %v206
    %258 = vmatpush.msra.mxu0 %v204
    %259 = vmatpush.msra.mxu0 %v202
    %260 = vmatpush.msra.mxu0 %v200
    %261 = vmatpush.msra.mxu0 %v198
    %262 = vmatpush.msra.mxu0 %v196
    %263 = vmatmul.f32.gmra.mxu0 %v219
    %v264 = vpop.f32.mrf.mxu0
    %v265 = vadd.f32 %v214, %v264
    %266 = vmatmul.f32.gmra.mxu0 %v222
    %v267 = vpop.f32.mrf.mxu0
    %v268 = vadd.f32 %v214, %v267
    %269 = vdwg.mxu0
    %270 = vst [vmem:[#allocation2] sm:$0xff] %v242
    %271 = vst.msk [vmem:[#allocation2 + $0x8] sm:$0xff] %vm217, %v265
    %272 = vst [vmem:[#allocation2 + $0x10] sm:$0xf] %v245
    %vm273 = vcmask 519168
    %274 = vst.msk [vmem:[#allocation2 + $0x18] sm:$0xf] %vm273, %v268
    %275 = vst.msk [vmem:[#allocation3] sm:$0xff] %vm217, 0.0
    %276 = vst.msk [vmem:[#allocation3 + $0x8] sm:$0xf] %vm273, 0.0
    %v277 = vld [vmem:[#allocation2] sm:$0x3]
    %v278 = vld [vmem:[#allocation2 + $0x8] sm:$0x3]
    %v279 = vld [vmem:[#allocation12] sm:$0xff]
    %v280 = vld [vmem:[#allocation12 + $0x8] sm:$0xff]
    %v281 = vld [vmem:[#allocation12 + $0x10] sm:$0xff]
    %v282 = vld [vmem:[#allocation12 + $0x18] sm:$0xff]
    %v283 = vld [vmem:[#allocation12 + $0x20] sm:$0xff]
    %v284 = vld [vmem:[#allocation12 + $0x28] sm:$0xff]
    %v285 = vld [vmem:[#allocation12 + $0x30] sm:$0xff]
    %v286 = vld [vmem:[#allocation12 + $0x38] sm:$0xff]
    %v287 = vld [vmem:[#allocation12 + $0x40] sm:$0xff]
    %v288 = vld [vmem:[#allocation12 + $0x48] sm:$0xff]
    %v289 = vld [vmem:[#allocation12 + $0x50] sm:$0xff]
    %v290 = vld [vmem:[#allocation12 + $0x58] sm:$0xff]
    %v291 = vld [vmem:[#allocation12 + $0x60] sm:$0xff]
    %v292 = vld [vmem:[#allocation12 + $0x68] sm:$0xff]
    %v293 = vld [vmem:[#allocation12 + $0x70] sm:$0xff]
    %v294 = vld [vmem:[#allocation12 + $0x78] sm:$0xff]
    %v295 = vld [vmem:[%s6] sm:$0x3]
    %v297 = vperm.slane %v295, 0
    %v298 = vperm.slane %v295, 1
    %v302 = vsel %vm217, 0.0, 0
    %304 = vmatpush.msra.mxu0 0.0
    %305 = vmatpush.msra.mxu0 0.0
    %306 = vmatpush.msra.mxu0 0.0
    %307 = vmatpush.msra.mxu0 0.0
    %308 = vmatpush.msra.mxu0 0.0
    %309 = vmatpush.msra.mxu0 0.0
    %310 = vmatpush.msra.mxu0 0.0
    %311 = vmatpush.msra.mxu0 0.0
    %312 = vmatpush.msra.mxu0 %v293
    %313 = vmatpush.msra.mxu0 %v291
    %314 = vmatpush.msra.mxu0 %v289
    %315 = vmatpush.msra.mxu0 %v287
    %316 = vmatpush.msra.mxu0 %v285
    %317 = vmatpush.msra.mxu0 %v283
    %318 = vmatpush.msra.mxu0 %v281
    %319 = vmatpush.msra.mxu0 %v279
    %320 = vmatmul.f32.gmra.mxu0 %v302
    %v321 = vpop.f32.mrf.mxu0
    %v322 = vadd.f32 %v297, %v321
    %323 = vdwg.mxu0
    %324 = vmatpush.msra.mxu0 0.0
    %325 = vmatpush.msra.mxu0 0.0
    %326 = vmatpush.msra.mxu0 0.0
    %327 = vmatpush.msra.mxu0 0.0
    %328 = vmatpush.msra.mxu0 0.0
    %329 = vmatpush.msra.mxu0 0.0
    %330 = vmatpush.msra.mxu0 0.0
    %331 = vmatpush.msra.mxu0 0.0
    %332 = vmatpush.msra.mxu0 %v294
    %333 = vmatpush.msra.mxu0 %v292
    %334 = vmatpush.msra.mxu0 %v290
    %335 = vmatpush.msra.mxu0 %v288
    %336 = vmatpush.msra.mxu0 %v286
    %337 = vmatpush.msra.mxu0 %v284
    %338 = vmatpush.msra.mxu0 %v282
    %339 = vmatpush.msra.mxu0 %v280
    %340 = vmatmul.f32.gmra.mxu0 %v302
    %v341 = vpop.f32.mrf.mxu0
    %v342 = vadd.f32 %v298, %v341
    %343 = vdwg.mxu0
    %v344 = vadd.f32 %v277, %v322
    %v345 = vxor.u32 %v344, 2147483648
    %v346 = vmul.f32 %v345, 1.442695
    %v347 = vpow.pop %v346
    %v348 = vadd.f32 %v347, 1.0
    %v349 = vrcp.pop %v348
    %v350 = vmul.f32 %v348, %v349
    %v351 = vsub.f32 1.0, %v350
    %v352 = vmul.f32 %v349, %v351
    %v353 = vadd.f32 %v349, %v352
    %vm354 = vweird.f32 %v348
    %vm355 = vweird.f32 %v349
    %vm356 = vmor %vm354, %vm355
    %v357 = vsel %vm356, %v349, %v353
    %v358 = vand.u32 2147483647, %v348
    %vm359 = vcmp.eq.f32.partialorder %v358, 8.507059e+37
    %v360 = vand.u32 %v348, 2147483648
    %v361 = vor.u32 1.1754944e-38, %v360
    %v362 = vsel %vm359, %v361, %v357
    %v363 = vmul.f32 1.0, %v362
    %v364 = vmul.f32 %v363, %v342
    %v365 = vadd.f32 %v278, %v364
    %v366 = vtanh.pop %v365
    %v367 = vsub.f32 1.0, %v363
    %369 = vrot.lane.b32.xlu0 %v366, 64
    %v370 = vpop.permute.xlu0 %369
    %v372 = vmul.f32 %v367, %v370
    %v373 = vmul.f32 %v363, 0.0
    %v374 = vadd.f32 %v372, %v373
    %376 = vrot.lane.b32.xlu0 %v374, 96
    %v377 = vpop.permute.xlu0 %376
    %v379 = vadd.f32 %v374, %v377
    %v380 = vmul.f32 %v379, 0.5
    %382 = vrot.lane.b32.xlu0 %v380, 96
    %v383 = vpop.permute.xlu0 %382
    %vm385 = vcmask 517376
    %386 = vst.msk [vmem:[#allocation3] sm:$0x3] %vm385, %v383
    %v387 = vld [vmem:[#allocation2] sm:$0xc]
    %v388 = vld [vmem:[#allocation2 + $0x8] sm:$0xc]
    %v389 = vld [vmem:[#allocation12] sm:$0xff]
    %v390 = vld [vmem:[#allocation12 + $0x8] sm:$0xff]
    %v391 = vld [vmem:[#allocation12 + $0x10] sm:$0xff]
    %v392 = vld [vmem:[#allocation12 + $0x18] sm:$0xff]
    %v393 = vld [vmem:[#allocation12 + $0x20] sm:$0xff]
    %v394 = vld [vmem:[#allocation12 + $0x28] sm:$0xff]
    %v395 = vld [vmem:[#allocation12 + $0x30] sm:$0xff]
    %v396 = vld [vmem:[#allocation12 + $0x38] sm:$0xff]
    %v397 = vld [vmem:[#allocation12 + $0x40] sm:$0xff]
    %v398 = vld [vmem:[#allocation12 + $0x48] sm:$0xff]
    %v399 = vld [vmem:[#allocation12 + $0x50] sm:$0xff]
    %v400 = vld [vmem:[#allocation12 + $0x58] sm:$0xff]
    %v401 = vld [vmem:[#allocation12 + $0x60] sm:$0xff]
    %v402 = vld [vmem:[#allocation12 + $0x68] sm:$0xff]
    %v403 = vld [vmem:[#allocation12 + $0x70] sm:$0xff]
    %v404 = vld [vmem:[#allocation12 + $0x78] sm:$0xff]
    %v405 = vld [vmem:[%s6] sm:$0x3]
    %v407 = vperm.slane %v405, 0
    %v408 = vperm.slane %v405, 1
    %411 = vrot.lane.b32.xlu0 %v374, 64
    %v412 = vpop.permute.xlu0 %411
    %v413 = vsel %vm217, %v412, 0
    %415 = vmatpush.msra.mxu0 0.0
    %416 = vmatpush.msra.mxu0 0.0
    %417 = vmatpush.msra.mxu0 0.0
    %418 = vmatpush.msra.mxu0 0.0
    %419 = vmatpush.msra.mxu0 0.0
    %420 = vmatpush.msra.mxu0 0.0
    %421 = vmatpush.msra.mxu0 0.0
    %422 = vmatpush.msra.mxu0 0.0
    %423 = vmatpush.msra.mxu0 %v403
    %424 = vmatpush.msra.mxu0 %v401
    %425 = vmatpush.msra.mxu0 %v399
    %426 = vmatpush.msra.mxu0 %v397
    %427 = vmatpush.msra.mxu0 %v395
    %428 = vmatpush.msra.mxu0 %v393
    %429 = vmatpush.msra.mxu0 %v391
    %430 = vmatpush.msra.mxu0 %v389
    %431 = vmatmul.f32.gmra.mxu0 %v413
    %v432 = vpop.f32.mrf.mxu0
    %v433 = vadd.f32 %v407, %v432
    %434 = vdwg.mxu0
    %435 = vmatpush.msra.mxu0 0.0
    %436 = vmatpush.msra.mxu0 0.0
    %437 = vmatpush.msra.mxu0 0.0
    %438 = vmatpush.msra.mxu0 0.0
    %439 = vmatpush.msra.mxu0 0.0
    %440 = vmatpush.msra.mxu0 0.0
    %441 = vmatpush.msra.mxu0 0.0
    %442 = vmatpush.msra.mxu0 0.0
    %443 = vmatpush.msra.mxu0 %v404
    %444 = vmatpush.msra.mxu0 %v402
    %445 = vmatpush.msra.mxu0 %v400
    %446 = vmatpush.msra.mxu0 %v398
    %447 = vmatpush.msra.mxu0 %v396
    %448 = vmatpush.msra.mxu0 %v394
    %449 = vmatpush.msra.mxu0 %v392
    %450 = vmatpush.msra.mxu0 %v390
    %451 = vmatmul.f32.gmra.mxu0 %v413
    %v452 = vpop.f32.mrf.mxu0
    %v453 = vadd.f32 %v408, %v452
    %454 = vdwg.mxu0
    %v456 = vrot.slane %v433, 6
    %v458 = vadd.f32 %v387, %v456
    %v459 = vxor.u32 %v458, 2147483648
    %v460 = vmul.f32 %v459, 1.442695
    %v461 = vpow.pop %v460
    %v462 = vadd.f32 %v461, 1.0
    %v463 = vrcp.pop %v462
    %v464 = vmul.f32 %v462, %v463
    %v465 = vsub.f32 1.0, %v464
    %v466 = vmul.f32 %v463, %v465
    %v467 = vadd.f32 %v463, %v466
    %vm468 = vweird.f32 %v462
    %vm469 = vweird.f32 %v463
    %vm470 = vmor %vm468, %vm469
    %v471 = vsel %vm470, %v463, %v467
    %v472 = vand.u32 2147483647, %v462
    %vm473 = vcmp.eq.f32.partialorder %v472, 8.507059e+37
    %v474 = vand.u32 %v462, 2147483648
    %v475 = vor.u32 1.1754944e-38, %v474
    %v476 = vsel %vm473, %v475, %v471
    %v477 = vmul.f32 1.0, %v476
    %v479 = vrot.slane %v453, 6
    %v481 = vmul.f32 %v477, %v479
    %v482 = vadd.f32 %v388, %v481
    %v483 = vtanh.pop %v482
    %v484 = vsub.f32 1.0, %v477
    %486 = vrot.lane.b32.xlu0 %v483, 64
    %v487 = vpop.permute.xlu0 %486
    %v489 = vmul.f32 %v484, %v487
    %v490 = vrot.slane %v374, 6
    %v492 = vmul.f32 %v477, %v490
    %v493 = vadd.f32 %v489, %v492
    %495 = vrot.lane.b32.xlu0 %v493, 96
    %v496 = vpop.permute.xlu0 %495
    %v498 = vadd.f32 %v493, %v496
    %v499 = vmul.f32 %v498, 0.5
    %501 = vrot.lane.b32.xlu0 %v499, 96
    %v502 = vpop.permute.xlu0 %501
    %vm504 = vcmask 519426
    %505 = vst.msk [vmem:[#allocation3] sm:$0xc] %vm504, %v502
    %v506 = vld [vmem:[#allocation2] sm:$0x30]
    %v507 = vld [vmem:[#allocation2 + $0x8] sm:$0x30]
    %v508 = vld [vmem:[#allocation12] sm:$0xff]
    %v509 = vld [vmem:[#allocation12 + $0x8] sm:$0xff]
    %v510 = vld [vmem:[#allocation12 + $0x10] sm:$0xff]
    %v511 = vld [vmem:[#allocation12 + $0x18] sm:$0xff]
    %v512 = vld [vmem:[#allocation12 + $0x20] sm:$0xff]
    %v513 = vld [vmem:[#allocation12 + $0x28] sm:$0xff]
    %v514 = vld [vmem:[#allocation12 + $0x30] sm:$0xff]
    %v515 = vld [vmem:[#allocation12 + $0x38] sm:$0xff]
    %v516 = vld [vmem:[#allocation12 + $0x40] sm:$0xff]
    %v517 = vld [vmem:[#allocation12 + $0x48] sm:$0xff]
    %v518 = vld [vmem:[#allocation12 + $0x50] sm:$0xff]
    %v519 = vld [vmem:[#allocation12 + $0x58] sm:$0xff]
    %v520 = vld [vmem:[#allocation12 + $0x60] sm:$0xff]
    %v521 = vld [vmem:[#allocation12 + $0x68] sm:$0xff]
    %v522 = vld [vmem:[#allocation12 + $0x70] sm:$0xff]
    %v523 = vld [vmem:[#allocation12 + $0x78] sm:$0xff]
    %v524 = vld [vmem:[%s6] sm:$0x3]
    %v526 = vperm.slane %v524, 0
    %v527 = vperm.slane %v524, 1
    %v530 = vrot.slane %v493, 2
    %531 = vrot.lane.b32.xlu0 %v530, 64
    %v532 = vpop.permute.xlu0 %531
    %v533 = vsel %vm217, %v532, 0
    %535 = vmatpush.msra.mxu0 0.0
    %536 = vmatpush.msra.mxu0 0.0
    %537 = vmatpush.msra.mxu0 0.0
    %538 = vmatpush.msra.mxu0 0.0
    %539 = vmatpush.msra.mxu0 0.0
    %540 = vmatpush.msra.mxu0 0.0
    %541 = vmatpush.msra.mxu0 0.0
    %542 = vmatpush.msra.mxu0 0.0
    %543 = vmatpush.msra.mxu0 %v522
    %544 = vmatpush.msra.mxu0 %v520
    %545 = vmatpush.msra.mxu0 %v518
    %546 = vmatpush.msra.mxu0 %v516
    %547 = vmatpush.msra.mxu0 %v514
    %548 = vmatpush.msra.mxu0 %v512
    %549 = vmatpush.msra.mxu0 %v510
    %550 = vmatpush.msra.mxu0 %v508
    %551 = vmatmul.f32.gmra.mxu0 %v533
    %v552 = vpop.f32.mrf.mxu0
    %v553 = vadd.f32 %v526, %v552
    %554 = vdwg.mxu0
    %555 = vmatpush.msra.mxu0 0.0
    %556 = vmatpush.msra.mxu0 0.0
    %557 = vmatpush.msra.mxu0 0.0
    %558 = vmatpush.msra.mxu0 0.0
    %559 = vmatpush.msra.mxu0 0.0
    %560 = vmatpush.msra.mxu0 0.0
    %561 = vmatpush.msra.mxu0 0.0
    %562 = vmatpush.msra.mxu0 0.0
    %563 = vmatpush.msra.mxu0 %v523
    %564 = vmatpush.msra.mxu0 %v521
    %565 = vmatpush.msra.mxu0 %v519
    %566 = vmatpush.msra.mxu0 %v517
    %567 = vmatpush.msra.mxu0 %v515
    %568 = vmatpush.msra.mxu0 %v513
    %569 = vmatpush.msra.mxu0 %v511
    %570 = vmatpush.msra.mxu0 %v509
    %571 = vmatmul.f32.gmra.mxu0 %v533
    %v572 = vpop.f32.mrf.mxu0
    %v573 = vadd.f32 %v527, %v572
    %574 = vdwg.mxu0
    %v576 = vrot.slane %v553, 4
    %v578 = vadd.f32 %v506, %v576
    %v579 = vxor.u32 %v578, 2147483648
    %v580 = vmul.f32 %v579, 1.442695
    %v581 = vpow.pop %v580
    %v582 = vadd.f32 %v581, 1.0
    %v583 = vrcp.pop %v582
    %v584 = vmul.f32 %v582, %v583
    %v585 = vsub.f32 1.0, %v584
    %v586 = vmul.f32 %v583, %v585
    %v587 = vadd.f32 %v583, %v586
    %vm588 = vweird.f32 %v582
    %vm589 = vweird.f32 %v583
    %vm590 = vmor %vm588, %vm589
    %v591 = vsel %vm590, %v583, %v587
    %v592 = vand.u32 2147483647, %v582
    %vm593 = vcmp.eq.f32.partialorder %v592, 8.507059e+37
    %v594 = vand.u32 %v582, 2147483648
    %v595 = vor.u32 1.1754944e-38, %v594
    %v596 = vsel %vm593, %v595, %v591
    %v597 = vmul.f32 1.0, %v596
    %v599 = vrot.slane %v573, 4
    %v601 = vmul.f32 %v597, %v599
    %v602 = vadd.f32 %v507, %v601
    %v603 = vtanh.pop %v602
    %v604 = vsub.f32 1.0, %v597
    %606 = vrot.lane.b32.xlu0 %v603, 64
    %v607 = vpop.permute.xlu0 %606
    %v609 = vmul.f32 %v604, %v607
    %v610 = vrot.slane %v493, 6
    %v612 = vmul.f32 %v597, %v610
    %v613 = vadd.f32 %v609, %v612
    %615 = vrot.lane.b32.xlu0 %v613, 96
    %v616 = vpop.permute.xlu0 %615
    %v618 = vadd.f32 %v613, %v616
    %v619 = vmul.f32 %v618, 0.5
    %621 = vrot.lane.b32.xlu0 %v619, 96
    %v622 = vpop.permute.xlu0 %621
    %vm624 = vcmask 521476
    %625 = vst.msk [vmem:[#allocation3] sm:$0x30] %vm624, %v622
    %v626 = vld [vmem:[#allocation2] sm:$0xc0]
    %v627 = vld [vmem:[#allocation2 + $0x8] sm:$0xc0]
    %v628 = vld [vmem:[#allocation12] sm:$0xff]
    %v629 = vld [vmem:[#allocation12 + $0x8] sm:$0xff]
    %v630 = vld [vmem:[#allocation12 + $0x10] sm:$0xff]
    %v631 = vld [vmem:[#allocation12 + $0x18] sm:$0xff]
    %v632 = vld [vmem:[#allocation12 + $0x20] sm:$0xff]
    %v633 = vld [vmem:[#allocation12 + $0x28] sm:$0xff]
    %v634 = vld [vmem:[#allocation12 + $0x30] sm:$0xff]
    %v635 = vld [vmem:[#allocation12 + $0x38] sm:$0xff]
    %v636 = vld [vmem:[#allocation12 + $0x40] sm:$0xff]
    %v637 = vld [vmem:[#allocation12 + $0x48] sm:$0xff]
    %v638 = vld [vmem:[#allocation12 + $0x50] sm:$0xff]
    %v639 = vld [vmem:[#allocation12 + $0x58] sm:$0xff]
    %v640 = vld [vmem:[#allocation12 + $0x60] sm:$0xff]
    %v641 = vld [vmem:[#allocation12 + $0x68] sm:$0xff]
    %v642 = vld [vmem:[#allocation12 + $0x70] sm:$0xff]
    %v643 = vld [vmem:[#allocation12 + $0x78] sm:$0xff]
    %v644 = vld [vmem:[%s6] sm:$0x3]
    %v646 = vperm.slane %v644, 0
    %v647 = vperm.slane %v644, 1
    %v650 = vrot.slane %v613, 4
    %651 = vrot.lane.b32.xlu0 %v650, 64
    %v652 = vpop.permute.xlu0 %651
    %v653 = vsel %vm217, %v652, 0
    %655 = vmatpush.msra.mxu0 0.0
    %656 = vmatpush.msra.mxu0 0.0
    %657 = vmatpush.msra.mxu0 0.0
    %658 = vmatpush.msra.mxu0 0.0
    %659 = vmatpush.msra.mxu0 0.0
    %660 = vmatpush.msra.mxu0 0.0
    %661 = vmatpush.msra.mxu0 0.0
    %662 = vmatpush.msra.mxu0 0.0
    %663 = vmatpush.msra.mxu0 %v642
    %664 = vmatpush.msra.mxu0 %v640
    %665 = vmatpush.msra.mxu0 %v638
    %666 = vmatpush.msra.mxu0 %v636
    %667 = vmatpush.msra.mxu0 %v634
    %668 = vmatpush.msra.mxu0 %v632
    %669 = vmatpush.msra.mxu0 %v630
    %670 = vmatpush.msra.mxu0 %v628
    %671 = vmatmul.f32.gmra.mxu0 %v653
    %v672 = vpop.f32.mrf.mxu0
    %v673 = vadd.f32 %v646, %v672
    %674 = vdwg.mxu0
    %675 = vmatpush.msra.mxu0 0.0
    %676 = vmatpush.msra.mxu0 0.0
    %677 = vmatpush.msra.mxu0 0.0
    %678 = vmatpush.msra.mxu0 0.0
    %679 = vmatpush.msra.mxu0 0.0
    %680 = vmatpush.msra.mxu0 0.0
    %681 = vmatpush.msra.mxu0 0.0
    %682 = vmatpush.msra.mxu0 0.0
    %683 = vmatpush.msra.mxu0 %v643
    %684 = vmatpush.msra.mxu0 %v641
    %685 = vmatpush.msra.mxu0 %v639
    %686 = vmatpush.msra.mxu0 %v637
    %687 = vmatpush.msra.mxu0 %v635
    %688 = vmatpush.msra.mxu0 %v633
    %689 = vmatpush.msra.mxu0 %v631
    %690 = vmatpush.msra.mxu0 %v629
    %691 = vmatmul.f32.gmra.mxu0 %v653
    %v692 = vpop.f32.mrf.mxu0
    %v693 = vadd.f32 %v647, %v692
    %694 = vdwg.mxu0
    %v696 = vrot.slane %v673, 2
    %v698 = vadd.f32 %v626, %v696
    %v699 = vxor.u32 %v698, 2147483648
    %v700 = vmul.f32 %v699, 1.442695
    %v701 = vpow.pop %v700
    %v702 = vadd.f32 %v701, 1.0
    %v703 = vrcp.pop %v702
    %v704 = vmul.f32 %v702, %v703
    %v705 = vsub.f32 1.0, %v704
    %v706 = vmul.f32 %v703, %v705
    %v707 = vadd.f32 %v703, %v706
    %vm708 = vweird.f32 %v702
    %vm709 = vweird.f32 %v703
    %vm710 = vmor %vm708, %vm709
    %v711 = vsel %vm710, %v703, %v707
    %v712 = vand.u32 2147483647, %v702
    %vm713 = vcmp.eq.f32.partialorder %v712, 8.507059e+37
    %v714 = vand.u32 %v702, 2147483648
    %v715 = vor.u32 1.1754944e-38, %v714
    %v716 = vsel %vm713, %v715, %v711
    %v717 = vmul.f32 1.0, %v716
    %v719 = vrot.slane %v693, 2
    %v721 = vmul.f32 %v717, %v719
    %v722 = vadd.f32 %v627, %v721
    %v723 = vtanh.pop %v722
    %v724 = vsub.f32 1.0, %v717
    %726 = vrot.lane.b32.xlu0 %v723, 64
    %v727 = vpop.permute.xlu0 %726
    %v729 = vmul.f32 %v724, %v727
    %v730 = vrot.slane %v613, 6
    %v732 = vmul.f32 %v717, %v730
    %v733 = vadd.f32 %v729, %v732
    %735 = vrot.lane.b32.xlu0 %v733, 96
    %v736 = vpop.permute.xlu0 %735
    %v738 = vadd.f32 %v733, %v736
    %v739 = vmul.f32 %v738, 0.5
    %741 = vrot.lane.b32.xlu0 %v739, 96
    %v742 = vpop.permute.xlu0 %741
    %vm744 = vcmask 523526
    %745 = vst.msk [vmem:[#allocation3] sm:$0xc0] %vm744, %v742
    %v746 = vld [vmem:[#allocation2 + $0x10] sm:$0x3]
    %v747 = vld [vmem:[#allocation2 + $0x18] sm:$0x3]
    %v748 = vld [vmem:[#allocation12] sm:$0xff]
    %v749 = vld [vmem:[#allocation12 + $0x8] sm:$0xff]
    %v750 = vld [vmem:[#allocation12 + $0x10] sm:$0xff]
    %v751 = vld [vmem:[#allocation12 + $0x18] sm:$0xff]
    %v752 = vld [vmem:[#allocation12 + $0x20] sm:$0xff]
    %v753 = vld [vmem:[#allocation12 + $0x28] sm:$0xff]
    %v754 = vld [vmem:[#allocation12 + $0x30] sm:$0xff]
    %v755 = vld [vmem:[#allocation12 + $0x38] sm:$0xff]
    %v756 = vld [vmem:[#allocation12 + $0x40] sm:$0xff]
    %v757 = vld [vmem:[#allocation12 + $0x48] sm:$0xff]
    %v758 = vld [vmem:[#allocation12 + $0x50] sm:$0xff]
    %v759 = vld [vmem:[#allocation12 + $0x58] sm:$0xff]
    %v760 = vld [vmem:[#allocation12 + $0x60] sm:$0xff]
    %v761 = vld [vmem:[#allocation12 + $0x68] sm:$0xff]
    %v762 = vld [vmem:[#allocation12 + $0x70] sm:$0xff]
    %v763 = vld [vmem:[#allocation12 + $0x78] sm:$0xff]
    %v764 = vld [vmem:[%s6] sm:$0x3]
    %v766 = vperm.slane %v764, 0
    %v767 = vperm.slane %v764, 1
    %v770 = vrot.slane %v733, 6
    %771 = vrot.lane.b32.xlu0 %v770, 64
    %v772 = vpop.permute.xlu0 %771
    %v773 = vsel %vm217, %v772, 0
    %775 = vmatpush.msra.mxu0 0.0
    %776 = vmatpush.msra.mxu0 0.0
    %777 = vmatpush.msra.mxu0 0.0
    %778 = vmatpush.msra.mxu0 0.0
    %779 = vmatpush.msra.mxu0 0.0
    %780 = vmatpush.msra.mxu0 0.0
    %781 = vmatpush.msra.mxu0 0.0
    %782 = vmatpush.msra.mxu0 0.0
    %783 = vmatpush.msra.mxu0 %v762
    %784 = vmatpush.msra.mxu0 %v760
    %785 = vmatpush.msra.mxu0 %v758
    %786 = vmatpush.msra.mxu0 %v756
    %787 = vmatpush.msra.mxu0 %v754
    %788 = vmatpush.msra.mxu0 %v752
    %789 = vmatpush.msra.mxu0 %v750
    %790 = vmatpush.msra.mxu0 %v748
    %791 = vmatmul.f32.gmra.mxu0 %v773
    %v792 = vpop.f32.mrf.mxu0
    %v793 = vadd.f32 %v766, %v792
    %794 = vdwg.mxu0
    %795 = vmatpush.msra.mxu0 0.0
    %796 = vmatpush.msra.mxu0 0.0
    %797 = vmatpush.msra.mxu0 0.0
    %798 = vmatpush.msra.mxu0 0.0
    %799 = vmatpush.msra.mxu0 0.0
    %800 = vmatpush.msra.mxu0 0.0
    %801 = vmatpush.msra.mxu0 0.0
    %802 = vmatpush.msra.mxu0 0.0
    %803 = vmatpush.msra.mxu0 %v763
    %804 = vmatpush.msra.mxu0 %v761
    %805 = vmatpush.msra.mxu0 %v759
    %806 = vmatpush.msra.mxu0 %v757
    %807 = vmatpush.msra.mxu0 %v755
    %808 = vmatpush.msra.mxu0 %v753
    %809 = vmatpush.msra.mxu0 %v751
    %810 = vmatpush.msra.mxu0 %v749
    %811 = vmatmul.f32.gmra.mxu0 %v773
    %v812 = vpop.f32.mrf.mxu0
    %v813 = vadd.f32 %v767, %v812
    %814 = vdwg.mxu0
    %v815 = vadd.f32 %v746, %v793
    %v816 = vxor.u32 %v815, 2147483648
    %v817 = vmul.f32 %v816, 1.442695
    %v818 = vpow.pop %v817
    %v819 = vadd.f32 %v818, 1.0
    %v820 = vrcp.pop %v819
    %v821 = vmul.f32 %v819, %v820
    %v822 = vsub.f32 1.0, %v821
    %v823 = vmul.f32 %v820, %v822
    %v824 = vadd.f32 %v820, %v823
    %vm825 = vweird.f32 %v819
    %vm826 = vweird.f32 %v820
    %vm827 = vmor %vm825, %vm826
    %v828 = vsel %vm827, %v820, %v824
    %v829 = vand.u32 2147483647, %v819
    %vm830 = vcmp.eq.f32.partialorder %v829, 8.507059e+37
    %v831 = vand.u32 %v819, 2147483648
    %v832 = vor.u32 1.1754944e-38, %v831
    %v833 = vsel %vm830, %v832, %v828
    %v834 = vmul.f32 1.0, %v833
    %v835 = vmul.f32 %v834, %v813
    %v836 = vadd.f32 %v747, %v835
    %v837 = vtanh.pop %v836
    %v838 = vsub.f32 1.0, %v834
    %840 = vrot.lane.b32.xlu0 %v837, 64
    %v841 = vpop.permute.xlu0 %840
    %v843 = vmul.f32 %v838, %v841
    %v845 = vmul.f32 %v834, %v770
    %v846 = vadd.f32 %v843, %v845
    %848 = vrot.lane.b32.xlu0 %v846, 96
    %v849 = vpop.permute.xlu0 %848
    %v851 = vadd.f32 %v846, %v849
    %v852 = vmul.f32 %v851, 0.5
    %854 = vrot.lane.b32.xlu0 %v852, 96
    %v855 = vpop.permute.xlu0 %854
    %857 = vst.msk [vmem:[#allocation3 + $0x8] sm:$0x3] %vm385, %v855
    %v858 = vld [vmem:[#allocation2 + $0x10] sm:$0xc]
    %v859 = vld [vmem:[#allocation2 + $0x18] sm:$0xc]
    %v860 = vld [vmem:[#allocation12] sm:$0xff]
    %v861 = vld [vmem:[#allocation12 + $0x8] sm:$0xff]
    %v862 = vld [vmem:[#allocation12 + $0x10] sm:$0xff]
    %v863 = vld [vmem:[#allocation12 + $0x18] sm:$0xff]
    %v864 = vld [vmem:[#allocation12 + $0x20] sm:$0xff]
    %v865 = vld [vmem:[#allocation12 + $0x28] sm:$0xff]
    %v866 = vld [vmem:[#allocation12 + $0x30] sm:$0xff]
    %v867 = vld [vmem:[#allocation12 + $0x38] sm:$0xff]
    %v868 = vld [vmem:[#allocation12 + $0x40] sm:$0xff]
    %v869 = vld [vmem:[#allocation12 + $0x48] sm:$0xff]
    %v870 = vld [vmem:[#allocation12 + $0x50] sm:$0xff]
    %v871 = vld [vmem:[#allocation12 + $0x58] sm:$0xff]
    %v872 = vld [vmem:[#allocation12 + $0x60] sm:$0xff]
    %v873 = vld [vmem:[#allocation12 + $0x68] sm:$0xff]
    %v874 = vld [vmem:[#allocation12 + $0x70] sm:$0xff]
    %v875 = vld [vmem:[#allocation12 + $0x78] sm:$0xff]
    %v876 = vld [vmem:[%s6] sm:$0x3]
    %v878 = vperm.slane %v876, 0
    %v879 = vperm.slane %v876, 1
    %882 = vrot.lane.b32.xlu0 %v846, 64
    %v883 = vpop.permute.xlu0 %882
    %v884 = vsel %vm217, %v883, 0
    %886 = vmatpush.msra.mxu0 0.0
    %887 = vmatpush.msra.mxu0 0.0
    %888 = vmatpush.msra.mxu0 0.0
    %889 = vmatpush.msra.mxu0 0.0
    %890 = vmatpush.msra.mxu0 0.0
    %891 = vmatpush.msra.mxu0 0.0
    %892 = vmatpush.msra.mxu0 0.0
    %893 = vmatpush.msra.mxu0 0.0
    %894 = vmatpush.msra.mxu0 %v874
    %895 = vmatpush.msra.mxu0 %v872
    %896 = vmatpush.msra.mxu0 %v870
    %897 = vmatpush.msra.mxu0 %v868
    %898 = vmatpush.msra.mxu0 %v866
    %899 = vmatpush.msra.mxu0 %v864
    %900 = vmatpush.msra.mxu0 %v862
    %901 = vmatpush.msra.mxu0 %v860
    %902 = vmatmul.f32.gmra.mxu0 %v884
    %v903 = vpop.f32.mrf.mxu0
    %v904 = vadd.f32 %v878, %v903
    %905 = vdwg.mxu0
    %906 = vmatpush.msra.mxu0 0.0
    %907 = vmatpush.msra.mxu0 0.0
    %908 = vmatpush.msra.mxu0 0.0
    %909 = vmatpush.msra.mxu0 0.0
    %910 = vmatpush.msra.mxu0 0.0
    %911 = vmatpush.msra.mxu0 0.0
    %912 = vmatpush.msra.mxu0 0.0
    %913 = vmatpush.msra.mxu0 0.0
    %914 = vmatpush.msra.mxu0 %v875
    %915 = vmatpush.msra.mxu0 %v873
    %916 = vmatpush.msra.mxu0 %v871
    %917 = vmatpush.msra.mxu0 %v869
    %918 = vmatpush.msra.mxu0 %v867
    %919 = vmatpush.msra.mxu0 %v865
    %920 = vmatpush.msra.mxu0 %v863
    %921 = vmatpush.msra.mxu0 %v861
    %922 = vmatmul.f32.gmra.mxu0 %v884
    %v923 = vpop.f32.mrf.mxu0
    %v924 = vadd.f32 %v879, %v923
    %925 = vdwg.mxu0
    %v927 = vrot.slane %v904, 6
    %v929 = vadd.f32 %v858, %v927
    %v930 = vxor.u32 %v929, 2147483648
    %v931 = vmul.f32 %v930, 1.442695
    %v932 = vpow.pop %v931
    %v933 = vadd.f32 %v932, 1.0
    %v934 = vrcp.pop %v933
    %v935 = vmul.f32 %v933, %v934
    %v936 = vsub.f32 1.0, %v935
    %v937 = vmul.f32 %v934, %v936
    %v938 = vadd.f32 %v934, %v937
    %vm939 = vweird.f32 %v933
    %vm940 = vweird.f32 %v934
    %vm941 = vmor %vm939, %vm940
    %v942 = vsel %vm941, %v934, %v938
    %v943 = vand.u32 2147483647, %v933
    %vm944 = vcmp.eq.f32.partialorder %v943, 8.507059e+37
    %v945 = vand.u32 %v933, 2147483648
    %v946 = vor.u32 1.1754944e-38, %v945
    %v947 = vsel %vm944, %v946, %v942
    %v948 = vmul.f32 1.0, %v947
    %v950 = vrot.slane %v924, 6
    %v952 = vmul.f32 %v948, %v950
    %v953 = vadd.f32 %v859, %v952
    %v954 = vtanh.pop %v953
    %v955 = vsub.f32 1.0, %v948
    %957 = vrot.lane.b32.xlu0 %v954, 64
    %v958 = vpop.permute.xlu0 %957
    %v960 = vmul.f32 %v955, %v958
    %v961 = vrot.slane %v846, 6
    %v963 = vmul.f32 %v948, %v961
    %v964 = vadd.f32 %v960, %v963
    %966 = vrot.lane.b32.xlu0 %v964, 96
    %v967 = vpop.permute.xlu0 %966
    %v969 = vadd.f32 %v964, %v967
    %v970 = vmul.f32 %v969, 0.5
    %972 = vrot.lane.b32.xlu0 %v970, 96
    %v973 = vpop.permute.xlu0 %972
    %975 = vst.msk [vmem:[#allocation3 + $0x8] sm:$0xc] %vm504, %v973
    %v976 = vld [vmem:[#allocation3] sm:$0xff]
    %v977 = vld [vmem:[#allocation3 + $0x8] sm:$0xf]
    %v978 = vld [vmem:[#allocation13] sm:$0xff]
    %v979 = vld [vmem:[#allocation13 + $0x8] sm:$0xff]
    %v980 = vld [vmem:[#allocation13 + $0x10] sm:$0xff]
    %v981 = vld [vmem:[#allocation13 + $0x18] sm:$0xff]
    %v982 = vld [vmem:[#allocation13 + $0x20] sm:$0xff]
    %v983 = vld [vmem:[#allocation13 + $0x28] sm:$0xff]
    %v984 = vld [vmem:[#allocation13 + $0x30] sm:$0xff]
    %v985 = vld [vmem:[#allocation13 + $0x38] sm:$0xff]
    %v986 = vld [vmem:[%s8] sm:$0x1]
    %v988 = vperm.slane %v986, 0
    %v991 = vsel %vm217, %v976, 0
    %v994 = vsel %vm217, %v977, 0
    %996 = vmatpush.msra.mxu0 0.0
    %997 = vmatpush.msra.mxu0 0.0
    %998 = vmatpush.msra.mxu0 0.0
    %999 = vmatpush.msra.mxu0 0.0
    %1000 = vmatpush.msra.mxu0 0.0
    %1001 = vmatpush.msra.mxu0 0.0
    %1002 = vmatpush.msra.mxu0 0.0
    %1003 = vmatpush.msra.mxu0 0.0
    %1004 = vmatpush.msra.mxu0 %v985
    %1005 = vmatpush.msra.mxu0 %v984
    %1006 = vmatpush.msra.mxu0 %v983
    %1007 = vmatpush.msra.mxu0 %v982
    %1008 = vmatpush.msra.mxu0 %v981
    %1009 = vmatpush.msra.mxu0 %v980
    %1010 = vmatpush.msra.mxu0 %v979
    %1011 = vmatpush.msra.mxu0 %v978
    %1012 = vmatmul.f32.gmra.mxu0 %v991
    %v1013 = vpop.f32.mrf.mxu0
    %v1014 = vadd.f32 %v988, %v1013
    %1015 = vmatmul.f32.gmra.mxu0 %v994
    %v1016 = vpop.f32.mrf.mxu0
    %v1017 = vadd.f32 %v988, %v1016
    %1018 = vdwg.mxu0
    %v1019 = vxor.u32 %v1014, 2147483648
    %v1020 = vxor.u32 %v1017, 2147483648
    %v1021 = vmul.f32 %v1019, 1.442695
    %v1022 = vpow.pop %v1021
    %v1023 = vmul.f32 %v1020, 1.442695
    %v1024 = vpow.pop %v1023
    %v1025 = vadd.f32 %v1022, 1.0
    %v1026 = vadd.f32 %v1024, 1.0
    %v1027 = vrcp.pop %v1025
    %v1028 = vmul.f32 %v1025, %v1027
    %v1029 = vsub.f32 1.0, %v1028
    %v1030 = vmul.f32 %v1027, %v1029
    %v1031 = vadd.f32 %v1027, %v1030
    %vm1032 = vweird.f32 %v1025
    %vm1033 = vweird.f32 %v1027
    %vm1034 = vmor %vm1032, %vm1033
    %v1035 = vsel %vm1034, %v1027, %v1031
    %v1036 = vand.u32 2147483647, %v1025
    %vm1037 = vcmp.eq.f32.partialorder %v1036, 8.507059e+37
    %v1038 = vand.u32 %v1025, 2147483648
    %v1039 = vor.u32 1.1754944e-38, %v1038
    %v1040 = vsel %vm1037, %v1039, %v1035
    %v1041 = vmul.f32 1.0, %v1040
    %v1042 = vrcp.pop %v1026
    %v1043 = vmul.f32 %v1026, %v1042
    %v1044 = vsub.f32 1.0, %v1043
    %v1045 = vmul.f32 %v1042, %v1044
    %v1046 = vadd.f32 %v1042, %v1045
    %vm1047 = vweird.f32 %v1026
    %vm1048 = vweird.f32 %v1042
    %vm1049 = vmor %vm1047, %vm1048
    %v1050 = vsel %vm1049, %v1042, %v1046
    %v1051 = vand.u32 2147483647, %v1026
    %vm1052 = vcmp.eq.f32.partialorder %v1051, 8.507059e+37
    %v1053 = vand.u32 %v1026, 2147483648
    %v1054 = vor.u32 1.1754944e-38, %v1053
    %v1055 = vsel %vm1052, %v1054, %v1050
    %v1056 = vmul.f32 1.0, %v1055
    %1059 = vrot.lane.b32.xlu0 %v1014, 32
    %v1060 = vpop.permute.xlu0 %1059
    %1061 = vrot.lane.b32.xlu0 %v1017, 32
    %v1062 = vpop.permute.xlu0 %1061
    %v1065 = vmul.f32 %v1041, %v1060
    %v1066 = vmul.f32 %v1056, %v1062
    %1069 = vrot.lane.b32.xlu0 %v1065, 64
    %v1070 = vpop.permute.xlu0 %1069
    %1071 = vrot.lane.b32.xlu0 %v1066, 64
    %v1072 = vpop.permute.xlu0 %1071
    %v1075 = vadd.f32 %v1014, %v1070
    %v1076 = vadd.f32 %v1017, %v1072
    %v1077 = vtanh.pop %v1075
    %v1078 = vtanh.pop %v1076
    %v1079 = vsub.f32 1.0, %v1041
    %v1080 = vsub.f32 1.0, %v1056
    %1083 = vrot.lane.b32.xlu0 %v1077, 96
    %v1084 = vpop.permute.xlu0 %1083
    %1085 = vrot.lane.b32.xlu0 %v1078, 96
    %v1086 = vpop.permute.xlu0 %1085
    %v1089 = vmul.f32 %v1079, %v1084
    %v1090 = vmul.f32 %v1080, %v1086
    %v1091 = vmul.f32 %v1041, %v976
    %v1092 = vmul.f32 %v1056, %v977
    %v1093 = vadd.f32 %v1089, %v1091
    %v1094 = vadd.f32 %v1090, %v1092
    %v1095 = vld [vmem:[#allocation15] sm:$0xff]
    %v1096 = vld [vmem:[#allocation15 + $0x8] sm:$0xff]
    %v1097 = vld [vmem:[#allocation15 + $0x10] sm:$0xff]
    %v1098 = vld [vmem:[#allocation15 + $0x18] sm:$0xff]
    %v1099 = vld [vmem:[%s10] sm:$0x1]
    %v1101 = vperm.slane %v1099, 0
    %1105 = vrot.lane.b32.xlu0 %v1093, 96
    %v1106 = vpop.permute.xlu0 %1105
    %1107 = vrot.lane.b32.xlu0 %v1094, 96
    %v1108 = vpop.permute.xlu0 %1107
    %vm1109 = vcmask 261120
    %v1110 = vsel %vm1109, %v1106, 0
    %v1112 = vsel %vm1109, %v1108, 0
    %1114 = vmatpush.msra.mxu0 0.0
    %1115 = vmatpush.msra.mxu0 0.0
    %1116 = vmatpush.msra.mxu0 0.0
    %1117 = vmatpush.msra.mxu0 0.0
    %1118 = vmatpush.msra.mxu0 0.0
    %1119 = vmatpush.msra.mxu0 0.0
    %1120 = vmatpush.msra.mxu0 0.0
    %1121 = vmatpush.msra.mxu0 0.0
    %1122 = vmatpush.msra.mxu0 0.0
    %1123 = vmatpush.msra.mxu0 0.0
    %1124 = vmatpush.msra.mxu0 0.0
    %1125 = vmatpush.msra.mxu0 0.0
    %1126 = vmatpush.msra.mxu0 %v1098
    %1127 = vmatpush.msra.mxu0 %v1097
    %1128 = vmatpush.msra.mxu0 %v1096
    %1129 = vmatpush.msra.mxu0 %v1095
    %1130 = vmatmul.f32.gmra.mxu0 %v1110
    %v1131 = vpop.f32.mrf.mxu0
    %v1132 = vadd.f32 %v1101, %v1131
    %1133 = vmatmul.f32.gmra.mxu0 %v1112
    %v1134 = vpop.f32.mrf.mxu0
    %v1135 = vadd.f32 %v1101, %v1134
    %1136 = vdwg.mxu0
    %v1137 = vtanh.pop %v1132
    %v1138 = vtanh.pop %v1135
    %1141 = vrot.lane.b32.xlu0 %v1137, 96
    %v1142 = vpop.permute.xlu0 %1141
    %1143 = vrot.lane.b32.xlu0 %v1138, 96
    %v1144 = vpop.permute.xlu0 %1143
    %vm1147 = vcmask 31744
    %1148 = vst.msk [vmem:[#allocation16] sm:$0xff] %vm1147, %v1142
    %vm1149 = vcmask 27648
    %1150 = vst.msk [vmem:[#allocation16 + $0x8] sm:$0xf] %vm1149, %v1144
    %v1151 = vmax.f32 %v1132, 0.0
    %v1152 = vmax.f32 %v1135, 0.0
    %1153 = vst.msk [vmem:[#allocation3] sm:$0xff] %vm1109, %v1151
    %vm1154 = vcmask 257024
    %1155 = vst.msk [vmem:[#allocation3 + $0x8] sm:$0xf] %vm1154, %v1152
    %vm1156 = vcmask 523520
    %1157 = vst.msk [vmem:[#allocation3] sm:$0xff] %vm1156, %v1093
    %vm1158 = vcmask 519424
    %1159 = vst.msk [vmem:[#allocation3 + $0x8] sm:$0xf] %vm1158, %v1094
    %v1160 = vld [vmem:[#allocation3] sm:$0xff]
    %v1161 = vld [vmem:[#allocation3 + $0x8] sm:$0xf]
    %v1162 = vld [vmem:[#allocation13] sm:$0xff]
    %v1163 = vld [vmem:[#allocation13 + $0x8] sm:$0xff]
    %v1164 = vld [vmem:[#allocation13 + $0x10] sm:$0xff]
    %v1165 = vld [vmem:[#allocation13 + $0x18] sm:$0xff]
    %v1166 = vld [vmem:[#allocation13 + $0x20] sm:$0xff]
    %v1167 = vld [vmem:[#allocation13 + $0x28] sm:$0xff]
    %v1168 = vld [vmem:[#allocation13 + $0x30] sm:$0xff]
    %v1169 = vld [vmem:[#allocation13 + $0x38] sm:$0xff]
    %v1170 = vld [vmem:[%s8] sm:$0x1]
    %v1172 = vperm.slane %v1170, 0
    %v1175 = vsel %vm217, %v1160, 0
    %v1178 = vsel %vm217, %v1161, 0
    %1180 = vmatpush.msra.mxu0 0.0
    %1181 = vmatpush.msra.mxu0 0.0
    %1182 = vmatpush.msra.mxu0 0.0
    %1183 = vmatpush.msra.mxu0 0.0
    %1184 = vmatpush.msra.mxu0 0.0
    %1185 = vmatpush.msra.mxu0 0.0
    %1186 = vmatpush.msra.mxu0 0.0
    %1187 = vmatpush.msra.mxu0 0.0
    %1188 = vmatpush.msra.mxu0 %v1169
    %1189 = vmatpush.msra.mxu0 %v1168
    %1190 = vmatpush.msra.mxu0 %v1167
    %1191 = vmatpush.msra.mxu0 %v1166
    %1192 = vmatpush.msra.mxu0 %v1165
    %1193 = vmatpush.msra.mxu0 %v1164
    %1194 = vmatpush.msra.mxu0 %v1163
    %1195 = vmatpush.msra.mxu0 %v1162
    %1196 = vmatmul.f32.gmra.mxu0 %v1175
    %v1197 = vpop.f32.mrf.mxu0
    %v1198 = vadd.f32 %v1172, %v1197
    %1199 = vmatmul.f32.gmra.mxu0 %v1178
    %v1200 = vpop.f32.mrf.mxu0
    %v1201 = vadd.f32 %v1172, %v1200
    %1202 = vdwg.mxu0
    %v1203 = vxor.u32 %v1198, 2147483648
    %v1204 = vxor.u32 %v1201, 2147483648
    %v1205 = vmul.f32 %v1203, 1.442695
    %v1206 = vpow.pop %v1205
    %v1207 = vmul.f32 %v1204, 1.442695
    %v1208 = vpow.pop %v1207
    %v1209 = vadd.f32 %v1206, 1.0
    %v1210 = vadd.f32 %v1208, 1.0
    %v1211 = vrcp.pop %v1209
    %v1212 = vmul.f32 %v1209, %v1211
    %v1213 = vsub.f32 1.0, %v1212
    %v1214 = vmul.f32 %v1211, %v1213
    %v1215 = vadd.f32 %v1211, %v1214
    %vm1216 = vweird.f32 %v1209
    %vm1217 = vweird.f32 %v1211
    %vm1218 = vmor %vm1216, %vm1217
    %v1219 = vsel %vm1218, %v1211, %v1215
    %v1220 = vand.u32 2147483647, %v1209
    %vm1221 = vcmp.eq.f32.partialorder %v1220, 8.507059e+37
    %v1222 = vand.u32 %v1209, 2147483648
    %v1223 = vor.u32 1.1754944e-38, %v1222
    %v1224 = vsel %vm1221, %v1223, %v1219
    %v1225 = vmul.f32 1.0, %v1224
    %v1226 = vrcp.pop %v1210
    %v1227 = vmul.f32 %v1210, %v1226
    %v1228 = vsub.f32 1.0, %v1227
    %v1229 = vmul.f32 %v1226, %v1228
    %v1230 = vadd.f32 %v1226, %v1229
    %vm1231 = vweird.f32 %v1210
    %vm1232 = vweird.f32 %v1226
    %vm1233 = vmor %vm1231, %vm1232
    %v1234 = vsel %vm1233, %v1226, %v1230
    %v1235 = vand.u32 2147483647, %v1210
    %vm1236 = vcmp.eq.f32.partialorder %v1235, 8.507059e+37
    %v1237 = vand.u32 %v1210, 2147483648
    %v1238 = vor.u32 1.1754944e-38, %v1237
    %v1239 = vsel %vm1236, %v1238, %v1234
    %v1240 = vmul.f32 1.0, %v1239
    %1243 = vrot.lane.b32.xlu0 %v1198, 32
    %v1244 = vpop.permute.xlu0 %1243
    %1245 = vrot.lane.b32.xlu0 %v1201, 32
    %v1246 = vpop.permute.xlu0 %1245
    %v1249 = vmul.f32 %v1225, %v1244
    %v1250 = vmul.f32 %v1240, %v1246
    %1253 = vrot.lane.b32.xlu0 %v1249, 64
    %v1254 = vpop.permute.xlu0 %1253
    %1255 = vrot.lane.b32.xlu0 %v1250, 64
    %v1256 = vpop.permute.xlu0 %1255
    %v1259 = vadd.f32 %v1198, %v1254
    %v1260 = vadd.f32 %v1201, %v1256
    %v1261 = vtanh.pop %v1259
    %v1262 = vtanh.pop %v1260
    %v1263 = vsub.f32 1.0, %v1225
    %v1264 = vsub.f32 1.0, %v1240
    %1267 = vrot.lane.b32.xlu0 %v1261, 96
    %v1268 = vpop.permute.xlu0 %1267
    %1269 = vrot.lane.b32.xlu0 %v1262, 96
    %v1270 = vpop.permute.xlu0 %1269
    %v1273 = vmul.f32 %v1263, %v1268
    %v1274 = vmul.f32 %v1264, %v1270
    %v1275 = vmul.f32 %v1225, %v1160
    %v1276 = vmul.f32 %v1240, %v1161
    %v1277 = vadd.f32 %v1273, %v1275
    %v1278 = vadd.f32 %v1274, %v1276
    %v1279 = vld [vmem:[#allocation15] sm:$0xff]
    %v1280 = vld [vmem:[#allocation15 + $0x8] sm:$0xff]
    %v1281 = vld [vmem:[#allocation15 + $0x10] sm:$0xff]
    %v1282 = vld [vmem:[#allocation15 + $0x18] sm:$0xff]
    %v1283 = vld [vmem:[%s10] sm:$0x1]
    %v1285 = vperm.slane %v1283, 0
    %1289 = vrot.lane.b32.xlu0 %v1277, 96
    %v1290 = vpop.permute.xlu0 %1289
    %1291 = vrot.lane.b32.xlu0 %v1278, 96
    %v1292 = vpop.permute.xlu0 %1291
    %v1293 = vsel %vm1109, %v1290, 0
    %v1295 = vsel %vm1109, %v1292, 0
    %1297 = vmatpush.msra.mxu0 0.0
    %1298 = vmatpush.msra.mxu0 0.0
    %1299 = vmatpush.msra.mxu0 0.0
    %1300 = vmatpush.msra.mxu0 0.0
    %1301 = vmatpush.msra.mxu0 0.0
    %1302 = vmatpush.msra.mxu0 0.0
    %1303 = vmatpush.msra.mxu0 0.0
    %1304 = vmatpush.msra.mxu0 0.0
    %1305 = vmatpush.msra.mxu0 0.0
    %1306 = vmatpush.msra.mxu0 0.0
    %1307 = vmatpush.msra.mxu0 0.0
    %1308 = vmatpush.msra.mxu0 0.0
    %1309 = vmatpush.msra.mxu0 %v1282
    %1310 = vmatpush.msra.mxu0 %v1281
    %1311 = vmatpush.msra.mxu0 %v1280
    %1312 = vmatpush.msra.mxu0 %v1279
    %1313 = vmatmul.f32.gmra.mxu0 %v1293
    %v1314 = vpop.f32.mrf.mxu0
    %v1315 = vadd.f32 %v1285, %v1314
    %1316 = vmatmul.f32.gmra.mxu0 %v1295
    %v1317 = vpop.f32.mrf.mxu0
    %v1318 = vadd.f32 %v1285, %v1317
    %1319 = vdwg.mxu0
    %v1320 = vtanh.pop %v1315
    %v1321 = vtanh.pop %v1318
    %1324 = vrot.lane.b32.xlu0 %v1320, 100
    %v1325 = vpop.permute.xlu0 %1324
    %1326 = vrot.lane.b32.xlu0 %v1321, 100
    %v1327 = vpop.permute.xlu0 %1326
    %vm1330 = vcmask 64544
    %1331 = vst.msk [vmem:[#allocation16] sm:$0xff] %vm1330, %v1325
    %vm1332 = vcmask 60448
    %1333 = vst.msk [vmem:[#allocation16 + $0x8] sm:$0xf] %vm1332, %v1327
    %v1334 = vmax.f32 %v1315, 0.0
    %v1335 = vmax.f32 %v1318, 0.0
    %1336 = vst.msk [vmem:[#allocation3] sm:$0xff] %vm1109, %v1334
    %1337 = vst.msk [vmem:[#allocation3 + $0x8] sm:$0xf] %vm1154, %v1335
    %1338 = vst.msk [vmem:[#allocation3] sm:$0xff] %vm1156, %v1277
    %1339 = vst.msk [vmem:[#allocation3 + $0x8] sm:$0xf] %vm1158, %v1278
    %v1340 = vld [vmem:[#allocation3] sm:$0xff]
    %v1341 = vld [vmem:[#allocation3 + $0x8] sm:$0xf]
    %v1342 = vld [vmem:[#allocation13] sm:$0xff]
    %v1343 = vld [vmem:[#allocation13 + $0x8] sm:$0xff]
    %v1344 = vld [vmem:[#allocation13 + $0x10] sm:$0xff]
    %v1345 = vld [vmem:[#allocation13 + $0x18] sm:$0xff]
    %v1346 = vld [vmem:[#allocation13 + $0x20] sm:$0xff]
    %v1347 = vld [vmem:[#allocation13 + $0x28] sm:$0xff]
    %v1348 = vld [vmem:[#allocation13 + $0x30] sm:$0xff]
    %v1349 = vld [vmem:[#allocation13 + $0x38] sm:$0xff]
    %v1350 = vld [vmem:[%s8] sm:$0x1]
    %v1352 = vperm.slane %v1350, 0
    %v1355 = vsel %vm217, %v1340, 0
    %v1358 = vsel %vm217, %v1341, 0
    %1360 = vmatpush.msra.mxu0 0.0
    %1361 = vmatpush.msra.mxu0 0.0
    %1362 = vmatpush.msra.mxu0 0.0
    %1363 = vmatpush.msra.mxu0 0.0
    %1364 = vmatpush.msra.mxu0 0.0
    %1365 = vmatpush.msra.mxu0 0.0
    %1366 = vmatpush.msra.mxu0 0.0
    %1367 = vmatpush.msra.mxu0 0.0
    %1368 = vmatpush.msra.mxu0 %v1349
    %1369 = vmatpush.msra.mxu0 %v1348
    %1370 = vmatpush.msra.mxu0 %v1347
    %1371 = vmatpush.msra.mxu0 %v1346
    %1372 = vmatpush.msra.mxu0 %v1345
    %1373 = vmatpush.msra.mxu0 %v1344
    %1374 = vmatpush.msra.mxu0 %v1343
    %1375 = vmatpush.msra.mxu0 %v1342
    %1376 = vmatmul.f32.gmra.mxu0 %v1355
    %v1377 = vpop.f32.mrf.mxu0
    %v1378 = vadd.f32 %v1352, %v1377
    %1379 = vmatmul.f32.gmra.mxu0 %v1358
    %v1380 = vpop.f32.mrf.mxu0
    %v1381 = vadd.f32 %v1352, %v1380
    %1382 = vdwg.mxu0
    %v1383 = vxor.u32 %v1378, 2147483648
    %v1384 = vxor.u32 %v1381, 2147483648
    %v1385 = vmul.f32 %v1383, 1.442695
    %v1386 = vpow.pop %v1385
    %v1387 = vmul.f32 %v1384, 1.442695
    %v1388 = vpow.pop %v1387
    %v1389 = vadd.f32 %v1386, 1.0
    %v1390 = vadd.f32 %v1388, 1.0
    %v1391 = vrcp.pop %v1389
    %v1392 = vmul.f32 %v1389, %v1391
    %v1393 = vsub.f32 1.0, %v1392
    %v1394 = vmul.f32 %v1391, %v1393
    %v1395 = vadd.f32 %v1391, %v1394
    %vm1396 = vweird.f32 %v1389
    %vm1397 = vweird.f32 %v1391
    %vm1398 = vmor %vm1396, %vm1397
    %v1399 = vsel %vm1398, %v1391, %v1395
    %v1400 = vand.u32 2147483647, %v1389
    %vm1401 = vcmp.eq.f32.partialorder %v1400, 8.507059e+37
    %v1402 = vand.u32 %v1389, 2147483648
    %v1403 = vor.u32 1.1754944e-38, %v1402
    %v1404 = vsel %vm1401, %v1403, %v1399
    %v1405 = vmul.f32 1.0, %v1404
    %v1406 = vrcp.pop %v1390
    %v1407 = vmul.f32 %v1390, %v1406
    %v1408 = vsub.f32 1.0, %v1407
    %v1409 = vmul.f32 %v1406, %v1408
    %v1410 = vadd.f32 %v1406, %v1409
    %vm1411 = vweird.f32 %v1390
    %vm1412 = vweird.f32 %v1406
    %vm1413 = vmor %vm1411, %vm1412
    %v1414 = vsel %vm1413, %v1406, %v1410
    %v1415 = vand.u32 2147483647, %v1390
    %vm1416 = vcmp.eq.f32.partialorder %v1415, 8.507059e+37
    %v1417 = vand.u32 %v1390, 2147483648
    %v1418 = vor.u32 1.1754944e-38, %v1417
    %v1419 = vsel %vm1416, %v1418, %v1414
    %v1420 = vmul.f32 1.0, %v1419
    %1423 = vrot.lane.b32.xlu0 %v1378, 32
    %v1424 = vpop.permute.xlu0 %1423
    %1425 = vrot.lane.b32.xlu0 %v1381, 32
    %v1426 = vpop.permute.xlu0 %1425
    %v1429 = vmul.f32 %v1405, %v1424
    %v1430 = vmul.f32 %v1420, %v1426
    %1433 = vrot.lane.b32.xlu0 %v1429, 64
    %v1434 = vpop.permute.xlu0 %1433
    %1435 = vrot.lane.b32.xlu0 %v1430, 64
    %v1436 = vpop.permute.xlu0 %1435
    %v1439 = vadd.f32 %v1378, %v1434
    %v1440 = vadd.f32 %v1381, %v1436
    %v1441 = vtanh.pop %v1439
    %v1442 = vtanh.pop %v1440
    %v1443 = vsub.f32 1.0, %v1405
    %v1444 = vsub.f32 1.0, %v1420
    %1447 = vrot.lane.b32.xlu0 %v1441, 96
    %v1448 = vpop.permute.xlu0 %1447
    %1449 = vrot.lane.b32.xlu0 %v1442, 96
    %v1450 = vpop.permute.xlu0 %1449
    %v1453 = vmul.f32 %v1443, %v1448
    %v1454 = vmul.f32 %v1444, %v1450
    %v1455 = vmul.f32 %v1405, %v1340
    %v1456 = vmul.f32 %v1420, %v1341
    %v1457 = vadd.f32 %v1453, %v1455
    %v1458 = vadd.f32 %v1454, %v1456
    %v1459 = vld [vmem:[#allocation15] sm:$0xff]
    %v1460 = vld [vmem:[#allocation15 + $0x8] sm:$0xff]
    %v1461 = vld [vmem:[#allocation15 + $0x10] sm:$0xff]
    %v1462 = vld [vmem:[#allocation15 + $0x18] sm:$0xff]
    %v1463 = vld [vmem:[%s10] sm:$0x1]
    %v1465 = vperm.slane %v1463, 0
    %1469 = vrot.lane.b32.xlu0 %v1457, 96
    %v1470 = vpop.permute.xlu0 %1469
    %1471 = vrot.lane.b32.xlu0 %v1458, 96
    %v1472 = vpop.permute.xlu0 %1471
    %v1473 = vsel %vm1109, %v1470, 0
    %v1475 = vsel %vm1109, %v1472, 0
    %1477 = vmatpush.msra.mxu0 0.0
    %1478 = vmatpush.msra.mxu0 0.0
    %1479 = vmatpush.msra.mxu0 0.0
    %1480 = vmatpush.msra.mxu0 0.0
    %1481 = vmatpush.msra.mxu0 0.0
    %1482 = vmatpush.msra.mxu0 0.0
    %1483 = vmatpush.msra.mxu0 0.0
    %1484 = vmatpush.msra.mxu0 0.0
    %1485 = vmatpush.msra.mxu0 0.0
    %1486 = vmatpush.msra.mxu0 0.0
    %1487 = vmatpush.msra.mxu0 0.0
    %1488 = vmatpush.msra.mxu0 0.0
    %1489 = vmatpush.msra.mxu0 %v1462
    %1490 = vmatpush.msra.mxu0 %v1461
    %1491 = vmatpush.msra.mxu0 %v1460
    %1492 = vmatpush.msra.mxu0 %v1459
    %1493 = vmatmul.f32.gmra.mxu0 %v1473
    %v1494 = vpop.f32.mrf.mxu0
    %v1495 = vadd.f32 %v1465, %v1494
    %1496 = vmatmul.f32.gmra.mxu0 %v1475
    %v1497 = vpop.f32.mrf.mxu0
    %v1498 = vadd.f32 %v1465, %v1497
    %1499 = vdwg.mxu0
    %v1500 = vtanh.pop %v1495
    %v1501 = vtanh.pop %v1498
    %1504 = vrot.lane.b32.xlu0 %v1500, 104
    %v1505 = vpop.permute.xlu0 %1504
    %1506 = vrot.lane.b32.xlu0 %v1501, 104
    %v1507 = vpop.permute.xlu0 %1506
    %vm1510 = vcmask 97344
    %1511 = vst.msk [vmem:[#allocation16] sm:$0xff] %vm1510, %v1505
    %vm1512 = vcmask 93248
    %1513 = vst.msk [vmem:[#allocation16 + $0x8] sm:$0xf] %vm1512, %v1507
    %v1514 = vmax.f32 %v1495, 0.0
    %v1515 = vmax.f32 %v1498, 0.0
    %1516 = vst.msk [vmem:[#allocation3] sm:$0xff] %vm1109, %v1514
    %1517 = vst.msk [vmem:[#allocation3 + $0x8] sm:$0xf] %vm1154, %v1515
    %1518 = vst.msk [vmem:[#allocation3] sm:$0xff] %vm1156, %v1457
    %1519 = vst.msk [vmem:[#allocation3 + $0x8] sm:$0xf] %vm1158, %v1458
    %v1520 = vld [vmem:[#allocation3] sm:$0xff]
    %v1521 = vld [vmem:[#allocation3 + $0x8] sm:$0xf]
    %v1522 = vld [vmem:[#allocation13] sm:$0xff]
    %v1523 = vld [vmem:[#allocation13 + $0x8] sm:$0xff]
    %v1524 = vld [vmem:[#allocation13 + $0x10] sm:$0xff]
    %v1525 = vld [vmem:[#allocation13 + $0x18] sm:$0xff]
    %v1526 = vld [vmem:[#allocation13 + $0x20] sm:$0xff]
    %v1527 = vld [vmem:[#allocation13 + $0x28] sm:$0xff]
    %v1528 = vld [vmem:[#allocation13 + $0x30] sm:$0xff]
    %v1529 = vld [vmem:[#allocation13 + $0x38] sm:$0xff]
    %v1530 = vld [vmem:[%s8] sm:$0x1]
    %v1532 = vperm.slane %v1530, 0
    %v1535 = vsel %vm217, %v1520, 0
    %v1538 = vsel %vm217, %v1521, 0
    %1540 = vmatpush.msra.mxu0 0.0
    %1541 = vmatpush.msra.mxu0 0.0
    %1542 = vmatpush.msra.mxu0 0.0
    %1543 = vmatpush.msra.mxu0 0.0
    %1544 = vmatpush.msra.mxu0 0.0
    %1545 = vmatpush.msra.mxu0 0.0
    %1546 = vmatpush.msra.mxu0 0.0
    %1547 = vmatpush.msra.mxu0 0.0
    %1548 = vmatpush.msra.mxu0 %v1529
    %1549 = vmatpush.msra.mxu0 %v1528
    %1550 = vmatpush.msra.mxu0 %v1527
    %1551 = vmatpush.msra.mxu0 %v1526
    %1552 = vmatpush.msra.mxu0 %v1525
    %1553 = vmatpush.msra.mxu0 %v1524
    %1554 = vmatpush.msra.mxu0 %v1523
    %1555 = vmatpush.msra.mxu0 %v1522
    %1556 = vmatmul.f32.gmra.mxu0 %v1535
    %v1557 = vpop.f32.mrf.mxu0
    %v1558 = vadd.f32 %v1532, %v1557
    %1559 = vmatmul.f32.gmra.mxu0 %v1538
    %v1560 = vpop.f32.mrf.mxu0
    %v1561 = vadd.f32 %v1532, %v1560
    %1562 = vdwg.mxu0
    %v1563 = vxor.u32 %v1558, 2147483648
    %v1564 = vxor.u32 %v1561, 2147483648
    %v1565 = vmul.f32 %v1563, 1.442695
    %v1566 = vpow.pop %v1565
    %v1567 = vmul.f32 %v1564, 1.442695
    %v1568 = vpow.pop %v1567
    %v1569 = vadd.f32 %v1566, 1.0
    %v1570 = vadd.f32 %v1568, 1.0
    %v1571 = vrcp.pop %v1569
    %v1572 = vmul.f32 %v1569, %v1571
    %v1573 = vsub.f32 1.0, %v1572
    %v1574 = vmul.f32 %v1571, %v1573
    %v1575 = vadd.f32 %v1571, %v1574
    %vm1576 = vweird.f32 %v1569
    %vm1577 = vweird.f32 %v1571
    %vm1578 = vmor %vm1576, %vm1577
    %v1579 = vsel %vm1578, %v1571, %v1575
    %v1580 = vand.u32 2147483647, %v1569
    %vm1581 = vcmp.eq.f32.partialorder %v1580, 8.507059e+37
    %v1582 = vand.u32 %v1569, 2147483648
    %v1583 = vor.u32 1.1754944e-38, %v1582
    %v1584 = vsel %vm1581, %v1583, %v1579
    %v1585 = vmul.f32 1.0, %v1584
    %v1586 = vrcp.pop %v1570
    %v1587 = vmul.f32 %v1570, %v1586
    %v1588 = vsub.f32 1.0, %v1587
    %v1589 = vmul.f32 %v1586, %v1588
    %v1590 = vadd.f32 %v1586, %v1589
    %vm1591 = vweird.f32 %v1570
    %vm1592 = vweird.f32 %v1586
    %vm1593 = vmor %vm1591, %vm1592
    %v1594 = vsel %vm1593, %v1586, %v1590
    %v1595 = vand.u32 2147483647, %v1570
    %vm1596 = vcmp.eq.f32.partialorder %v1595, 8.507059e+37
    %v1597 = vand.u32 %v1570, 2147483648
    %v1598 = vor.u32 1.1754944e-38, %v1597
    %v1599 = vsel %vm1596, %v1598, %v1594
    %v1600 = vmul.f32 1.0, %v1599
    %1603 = vrot.lane.b32.xlu0 %v1558, 32
    %v1604 = vpop.permute.xlu0 %1603
    %1605 = vrot.lane.b32.xlu0 %v1561, 32
    %v1606 = vpop.permute.xlu0 %1605
    %v1609 = vmul.f32 %v1585, %v1604
    %v1610 = vmul.f32 %v1600, %v1606
    %1613 = vrot.lane.b32.xlu0 %v1609, 64
    %v1614 = vpop.permute.xlu0 %1613
    %1615 = vrot.lane.b32.xlu0 %v1610, 64
    %v1616 = vpop.permute.xlu0 %1615
    %v1619 = vadd.f32 %v1558, %v1614
    %v1620 = vadd.f32 %v1561, %v1616
    %v1621 = vtanh.pop %v1619
    %v1622 = vtanh.pop %v1620
    %v1623 = vsub.f32 1.0, %v1585
    %v1624 = vsub.f32 1.0, %v1600
    %1627 = vrot.lane.b32.xlu0 %v1621, 96
    %v1628 = vpop.permute.xlu0 %1627
    %1629 = vrot.lane.b32.xlu0 %v1622, 96
    %v1630 = vpop.permute.xlu0 %1629
    %v1633 = vmul.f32 %v1623, %v1628
    %v1634 = vmul.f32 %v1624, %v1630
    %v1635 = vmul.f32 %v1585, %v1520
    %v1636 = vmul.f32 %v1600, %v1521
    %v1637 = vadd.f32 %v1633, %v1635
    %v1638 = vadd.f32 %v1634, %v1636
    %v1639 = vld [vmem:[#allocation15] sm:$0xff]
    %v1640 = vld [vmem:[#allocation15 + $0x8] sm:$0xff]
    %v1641 = vld [vmem:[#allocation15 + $0x10] sm:$0xff]
    %v1642 = vld [vmem:[#allocation15 + $0x18] sm:$0xff]
    %v1643 = vld [vmem:[%s10] sm:$0x1]
    %v1645 = vperm.slane %v1643, 0
    %1649 = vrot.lane.b32.xlu0 %v1637, 96
    %v1650 = vpop.permute.xlu0 %1649
    %1651 = vrot.lane.b32.xlu0 %v1638, 96
    %v1652 = vpop.permute.xlu0 %1651
    %v1653 = vsel %vm1109, %v1650, 0
    %v1655 = vsel %vm1109, %v1652, 0
    %1657 = vmatpush.msra.mxu0 0.0
    %1658 = vmatpush.msra.mxu0 0.0
    %1659 = vmatpush.msra.mxu0 0.0
    %1660 = vmatpush.msra.mxu0 0.0
    %1661 = vmatpush.msra.mxu0 0.0
    %1662 = vmatpush.msra.mxu0 0.0
    %1663 = vmatpush.msra.mxu0 0.0
    %1664 = vmatpush.msra.mxu0 0.0
    %1665 = vmatpush.msra.mxu0 0.0
    %1666 = vmatpush.msra.mxu0 0.0
    %1667 = vmatpush.msra.mxu0 0.0
    %1668 = vmatpush.msra.mxu0 0.0
    %1669 = vmatpush.msra.mxu0 %v1642
    %1670 = vmatpush.msra.mxu0 %v1641
    %1671 = vmatpush.msra.mxu0 %v1640
    %1672 = vmatpush.msra.mxu0 %v1639
    %1673 = vmatmul.f32.gmra.mxu0 %v1653
    %v1674 = vpop.f32.mrf.mxu0
    %v1675 = vadd.f32 %v1645, %v1674
    %1676 = vmatmul.f32.gmra.mxu0 %v1655
    %v1677 = vpop.f32.mrf.mxu0
    %v1678 = vadd.f32 %v1645, %v1677
    %1679 = vdwg.mxu0
    %v1680 = vtanh.pop %v1675
    %v1681 = vtanh.pop %v1678
    %1684 = vrot.lane.b32.xlu0 %v1680, 108
    %v1685 = vpop.permute.xlu0 %1684
    %1686 = vrot.lane.b32.xlu0 %v1681, 108
    %v1687 = vpop.permute.xlu0 %1686
    %vm1690 = vcmask 130144
    %1691 = vst.msk [vmem:[#allocation16] sm:$0xff] %vm1690, %v1685
    %vm1692 = vcmask 126048
    %1693 = vst.msk [vmem:[#allocation16 + $0x8] sm:$0xf] %vm1692, %v1687
    // Predicated region
    $region74: #{tpu_custom_call.1} parent=1 // pred_check
      _
    $region75: #{tpu_custom_call.1} parent=1 // pred_check_branch
      %1695 = sbr.rel (0) target = $region77
    $region76: #{tpu_custom_call.1} parent=1 // pred_region
      %1697 = vsyncadd [#allocation6], 0
      %s1698 = sshll.u32 [#allocation16], 4
      %s1699 = int_to_ptr.vmem [resolvable:$true] %s1698
      %s1700 = sshll.u32 %s11, 4
      %s1701 = int_to_ptr.hbm [resolvable:$true] %s1700
      %1706 = dma.vmem_to_hbm [thread:$0]  %s1699, 256, %s1701, [#allocation6], 128, 128, 8
    $region77: #{tpu_custom_call.1} parent=1 // pred_fallthru
      _
    // Predicated region
    $region78: #{tpu_custom_call.1} parent=1 // pred_check
      _
    $region79: #{tpu_custom_call.1} parent=1 // pred_check_branch
      %1708 = sbr.rel (0) target = $region81
    $region80: #{tpu_custom_call.1} parent=1 // pred_region
      %1710 = dma.done [#allocation6], 256
    $region81: #{tpu_custom_call.1} parent=1 // pred_fallthru
      _
    %1711 = vsyncpa [#allocation5], 1
    %1712 = vsyncpa [#allocation8], 1
    %1713 = vsyncpa [#allocation11], 1
    %1714 = vsyncpa [#allocation14], 1
    %1715 = vsyncpa [#allocation6], 1

</llo_original>
